<compile_context>
chip_gen: v5e
topology: v5e:2x2
jax: 0.10.0
libtpu: 0.0.40
codegen_flags: <defaults>
</compile_context>

<pallas_src>
import functools

import numpy as np
import jax
import jax.numpy as jnp
from jax.experimental import pallas as pl
from jax.experimental.pallas import tpu as pltpu

_EPS = 1e-5
_LANE = 128
_SUB = 16                         # row-tile granularity (bf16 sublane packing)
_N_SPLIT = 2                      # leading parallel axis: 2 partial-stat rows (v7x megacore)
_TILE_N_CAP = 2048                # allow big row tiles for narrow-channel layers (v6e/v5e)
_VMEM_BUDGET = 32 * 1024 * 1024   # working-set target (fits v7x 64 MiB physical w/ headroom)
_VMEM_LIMIT = 48 * 1024 * 1024    # explicit scoped-VMEM limit (raises v5e 16 MiB default)


def _round_up(a, b):
    return (a + b - 1) // b * b


# ---------------------------------------------------------------------------
# Kernels
# ---------------------------------------------------------------------------

def _first_kernel(x_ref, w_ref, y_ref, sum_ref, sq_ref):
    """Layer 0: y = (s ⊙ x) @ W (s pre-folded into x); emit y plus column Σ / Σ²."""
    @pl.when(pl.program_id(1) == 0)
    def _init():
        sum_ref[...] = jnp.zeros_like(sum_ref)
        sq_ref[...] = jnp.zeros_like(sq_ref)

    y = jnp.dot(x_ref[...], w_ref[...], preferred_element_type=jnp.float32)
    sum_ref[...] += jnp.sum(y, axis=0, keepdims=True)[None]
    sq_ref[...] += jnp.sum(y * y, axis=0, keepdims=True)[None]
    y_ref[...] = y.astype(y_ref.dtype)


def _bn_relu_scale(y_in_ref, s_ref, psum_ref, psq_ref, inv_n):
    """h = ReLU((y - mean) * rsqrt(var + eps)) * s, stats reduced from per-core partials."""
    mean = jnp.sum(psum_ref[...], axis=0) * inv_n          # [1, C]
    msq = jnp.sum(psq_ref[...], axis=0) * inv_n
    var = jnp.maximum(msq - mean * mean, 0.0)               # biased variance (torch BN)
    inv_std = jax.lax.rsqrt(var + _EPS)                     # EUP slot, ~free
    h = (y_in_ref[...].astype(jnp.float32) - mean) * inv_std
    return jnp.maximum(h, 0.0) * s_ref[...]                 # fold gcn scale for next matmul


def _mid_kernel(y_in_ref, s_ref, psum_ref, psq_ref, w_ref, y_ref, sum_ref, sq_ref, *, inv_n):
    """Hidden layer l: BN+ReLU+scale of y_l, matmul into y_{l+1}, accumulate its stats."""
    @pl.when(pl.program_id(1) == 0)
    def _init():
        sum_ref[...] = jnp.zeros_like(sum_ref)
        sq_ref[...] = jnp.zeros_like(sq_ref)

    h = _bn_relu_scale(y_in_ref, s_ref, psum_ref, psq_ref, inv_n)
    y = jnp.dot(h.astype(w_ref.dtype), w_ref[...], preferred_element_type=jnp.float32)
    sum_ref[...] += jnp.sum(y, axis=0, keepdims=True)[None]
    sq_ref[...] += jnp.sum(y * y, axis=0, keepdims=True)[None]
    y_ref[...] = y.astype(y_ref.dtype)


def _last_kernel(y_in_ref, s_ref, psum_ref, psq_ref, w_ref, b_ref, o_ref, *, inv_n):
    """Final layer: out = (ReLU(BN(y)) ⊙ s) @ W + b (no BN/ReLU afterwards)."""
    h = _bn_relu_scale(y_in_ref, s_ref, psum_ref, psq_ref, inv_n)
    y = jnp.dot(h.astype(w_ref.dtype), w_ref[...], preferred_element_type=jnp.float32)
    o_ref[...] = (y + b_ref[...]).astype(o_ref.dtype)


# ---------------------------------------------------------------------------
# pallas_call wrappers
# ---------------------------------------------------------------------------

def _pass_first(x_s, wt, *, tile_n, n_split):
    n_pad, cin = x_s.shape
    cout = wt.shape[1]
    tpc = n_pad // (tile_n * n_split)
    row_map = lambda c, j: (c * tpc + j, 0)
    stats_shape = jax.ShapeDtypeStruct((n_split, 1, cout), jnp.float32)
    stat_spec = pl.BlockSpec((1, 1, cout), lambda c, j: (c, 0, 0))
    return pl.pallas_call(
        _first_kernel,
        out_shape=(jax.ShapeDtypeStruct((n_pad, cout), x_s.dtype),
                   stats_shape, stats_shape),
        grid=(n_split, tpc),
        in_specs=[pl.BlockSpec((tile_n, cin), row_map),
                  pl.BlockSpec((cin, cout), lambda c, j: (0, 0))],
        out_specs=(pl.BlockSpec((tile_n, cout), row_map), stat_spec, stat_spec),
        compiler_params=pltpu.CompilerParams(
            dimension_semantics=("parallel", "arbitrary"),
            vmem_limit_bytes=_VMEM_LIMIT),
    )(x_s, wt)


def _pass_mid(y_prev, s, psum, psq, wt, *, tile_n, n_split, inv_n):
    n_pad, cin = y_prev.shape
    cout = wt.shape[1]
    tpc = n_pad // (tile_n * n_split)
    row_map = lambda c, j: (c * tpc + j, 0)
    full3 = lambda c, j: (0, 0, 0)
    stats_shape = jax.ShapeDtypeStruct((n_split, 1, cout), jnp.float32)
    stat_spec = pl.BlockSpec((1, 1, cout), lambda c, j: (c, 0, 0))
    kern = functools.partial(_mid_kernel, inv_n=inv_n)
    return pl.pallas_call(
        kern,
        out_shape=(jax.ShapeDtypeStruct((n_pad, cout), y_prev.dtype),
                   stats_shape, stats_shape),
        grid=(n_split, tpc),
        in_specs=[pl.BlockSpec((tile_n, cin), row_map),
                  pl.BlockSpec((tile_n, 1), row_map),
                  pl.BlockSpec((n_split, 1, cin), full3),
                  pl.BlockSpec((n_split, 1, cin), full3),
                  pl.BlockSpec((cin, cout), lambda c, j: (0, 0))],
        out_specs=(pl.BlockSpec((tile_n, cout), row_map), stat_spec, stat_spec),
        compiler_params=pltpu.CompilerParams(
            dimension_semantics=("parallel", "arbitrary"),
            vmem_limit_bytes=_VMEM_LIMIT),
    )(y_prev, s, psum, psq, wt)


def _pass_last(y_prev, s, psum, psq, wt, b, *, tile_n, inv_n):
    n_pad, cin = y_prev.shape
    cout = wt.shape[1]
    ns = psum.shape[0]
    row_map = lambda i: (i, 0)
    full3 = lambda i: (0, 0, 0)
    kern = functools.partial(_last_kernel, inv_n=inv_n)
    return pl.pallas_call(
        kern,
        out_shape=jax.ShapeDtypeStruct((n_pad, cout), jnp.float32),
        grid=(n_pad // tile_n,),
        in_specs=[pl.BlockSpec((tile_n, cin), row_map),
                  pl.BlockSpec((tile_n, 1), row_map),
                  pl.BlockSpec((ns, 1, cin), full3),
                  pl.BlockSpec((ns, 1, cin), full3),
                  pl.BlockSpec((cin, cout), lambda i: (0, 0)),
                  pl.BlockSpec((1, cout), lambda i: (0, 0))],
        out_specs=pl.BlockSpec((tile_n, cout), row_map),
        compiler_params=pltpu.CompilerParams(
            dimension_semantics=("parallel",),
            vmem_limit_bytes=_VMEM_LIMIT),
    )(y_prev, s, psum, psq, wt, b)


# ---------------------------------------------------------------------------
# Host-side glue
# ---------------------------------------------------------------------------

def gcn_row_scale(edge_index, num_nodes):
    """Effective per-node scale of the torch gcn_conv (numpy, once per graph)."""
    src, dst = np.asarray(edge_index[0]), np.asarray(edge_index[1])
    keep = src != dst                                  # remove_self_loops
    src, dst = src[keep], dst[keep]
    loops = np.arange(num_nodes, dtype=src.dtype)      # add_self_loops
    src = np.concatenate([src, loops])
    dst = np.concatenate([dst, loops])
    deg = np.bincount(dst, minlength=num_nodes).astype(np.float32)
    with np.errstate(divide="ignore"):
        dinv = deg ** -0.5
    dinv[np.isinf(dinv)] = 0.0
    edge_weight = dinv[src] * dinv[dst]
    scale = np.zeros(num_nodes, np.float32)
    np.add.at(scale, src, edge_weight)                 # index_add_ back onto src rows
    return scale


def init_mpnn_params(key, in_channels, hidden_channels, out_channels, num_layers):
    """xavier_uniform_(gain=1.414) weights, zero biases (torch layout [out, in])."""
    dims = [(in_channels, hidden_channels)]
    dims += [(hidden_channels, hidden_channels)] * (num_layers - 2)
    dims += [(hidden_channels, out_channels)]
    gain = 1.414
    weights, biases = [], []
    for (fan_in, fan_out) in dims:
        key, sub = jax.random.split(key)
        limit = gain * np.sqrt(6.0 / (fan_in + fan_out))
        weights.append(jax.random.uniform(sub, (fan_out, fan_in), jnp.float32, -limit, limit))
        biases.append(jnp.zeros((fan_out,), jnp.float32))
    return weights, biases


def prepare_params(weights, biases, *, use_bf16=True):
    """One-time: transpose to [Cin,Cout], zero-pad channels to 128, cast weights to bf16.

    Hidden-layer biases are dropped: they cancel exactly under affine-free batch-stat
    BatchNorm (mean(y + b) = mean(y) + b); only the final bias is kept.
    """
    dot_dtype = jnp.bfloat16 if use_bf16 else jnp.float32
    wts = []
    for w in weights:
        w = jnp.asarray(w, jnp.float32)
        cout, cin = w.shape
        cin_p, cout_p = _round_up(cin, _LANE), _round_up(cout, _LANE)
        wt = jnp.zeros((cin_p, cout_p), dot_dtype).at[:cin, :cout].set(w.T.astype(dot_dtype))
        wts.append(wt)
    b = jnp.asarray(biases[-1], jnp.float32)
    cout_p = _round_up(b.shape[0], _LANE)
    b_last = jnp.zeros((1, cout_p), jnp.float32).at[0, :b.shape[0]].set(b)
    return tuple(wts), b_last


def _pick_tile_n(n_nodes, dims):
    """Largest row tile whose double-buffered streams + resident weight fit the budget."""
    w_need, row_bytes = 0, 1
    for cin_p, cout_p in dims:
        w_need = max(w_need, 2 * cin_p * cout_p * 2)          # bf16 weight, double-buffered
        row_bytes = max(row_bytes, 12 * (cin_p + cout_p) + 16)  # streams + f32 temps + scale
    avail = _VMEM_BUDGET - w_need
    t = avail // row_bytes if avail > 0 else _SUB
    t = min(t, _TILE_N_CAP)
    t = max(_SUB, (t // _SUB) * _SUB)
    t = min(t, _round_up(max(n_nodes, _SUB), _SUB))
    return int(t)


@functools.partial(jax.jit, static_argnames=("n_real", "tile_n", "n_split"))
def _mpnn_forward_padded(x_s, s_p, wts, b_last, *, n_real, tile_n, n_split):
    inv_n = 1.0 / float(n_real)
    y, psum, psq = _pass_first(x_s, wts[0], tile_n=tile_n, n_split=n_split)
    for li in range(1, len(wts) - 1):
        # F.dropout(training=False) between layers is identity.
        y, psum, psq = _pass_mid(y, s_p, psum, psq, wts[li],
                                 tile_n=tile_n, n_split=n_split, inv_n=inv_n)
    return _pass_last(y, s_p, psum, psq, wts[-1], b_last, tile_n=tile_n, inv_n=inv_n)


def mpnn_forward(x, edge_index, weights, biases, *, use_conv=True, use_bf16=True):
    x = jnp.asarray(x, jnp.float32)
    N, cin = x.shape
    cout_final = weights[-1].shape[0]
    assert len(weights) >= 2, "MPNN builds at least two Linear layers"

    if use_conv:
        scale = gcn_row_scale(edge_index, N)
    else:
        scale = np.ones((N,), np.float32)

    dims = [(_round_up(w.shape[1], _LANE), _round_up(w.shape[0], _LANE)) for w in weights]
    tile_n = _pick_tile_n(N, dims)
    n_pad = _round_up(max(N, _SUB), tile_n * _N_SPLIT)

    dot_dtype = jnp.bfloat16 if use_bf16 else jnp.float32
    cin_p = dims[0][0]
    s = jnp.asarray(scale, jnp.float32)
    # Fold the conv scale into the first layer's input (row scale commutes with x @ W);
    # padded rows stay exactly zero. Stored bf16 to halve layer-1 DMA bytes.
    x_s = jnp.zeros((n_pad, cin_p), dot_dtype).at[:N, :cin].set(
        (x * s[:, None]).astype(dot_dtype))
    # Padded rows get scale 0 -> their stored activations are 0 and contribute 0 to BN stats.
    s_p = jnp.zeros((n_pad, 1), jnp.float32).at[:N, 0].set(s)

    wts, b_last = prepare_params(weights, biases, use_bf16=use_bf16)
    out_p = _mpnn_forward_padded(x_s, s_p, wts, b_last, n_real=N,
                                 tile_n=tile_n, n_split=_N_SPLIT)
    return out_p[:N, :cout_final]


def _reference_forward(x, scale, weights, biases):
    """Pure-JAX f32 reference of the torch forward (same math as the torch module)."""
    h = jnp.asarray(x, jnp.float32)
    s = jnp.asarray(scale, jnp.float32)[:, None]
    for i in range(len(weights) - 1):
        y = (h @ weights[i].T) * s + biases[i][None, :]
        mean = jnp.mean(y, axis=0, keepdims=True)
        var = jnp.mean((y - mean) ** 2, axis=0, keepdims=True)
        h = jnp.maximum((y - mean) * jax.lax.rsqrt(var + _EPS), 0.0)
    return (h @ weights[-1].T) * s + biases[-1][None, :]


if __name__ == "__main__":
    key = jax.random.PRNGKey(0)

    # Small, forward-consistent shapes.
    N = 16
    in_channels = 8
    hidden_channels = 32
    out_channels = 16
    num_layers = 3
    num_edges = 24

    k_x, k_src, k_dst, k_w = jax.random.split(key, 4)
    x = jax.random.normal(k_x, (N, in_channels), jnp.float32)
    src = jax.random.randint(k_src, (num_edges,), 0, N, jnp.int32)
    dst = jax.random.randint(k_dst, (num_edges,), 0, N, jnp.int32)
    edge_index = jnp.stack([src, dst], axis=0)             # [2, E]

    weights, biases = init_mpnn_params(
        k_w, in_channels, hidden_channels, out_channels, num_layers
    )

    out = mpnn_forward(x, edge_index, weights, biases, use_conv=True, use_bf16=True)
    out = jax.block_until_ready(out)
    assert out.shape == (N, out_channels)
    assert bool(jnp.all(jnp.isfinite(out)))

    # Sanity check vs. f32 reference (kernel matmuls/intermediates run in bf16).
    ref = _reference_forward(x, gcn_row_scale(edge_index, N), weights, biases)
    max_err = float(jnp.max(jnp.abs(out - ref)))
    assert max_err < 0.25, f"max abs err vs reference too large: {max_err}"

    print("KERNEL_OK")
</pallas_src>

<mosaic_0001>
module attributes {stable_mosaic.version = 11 : i64} {
  func.func @_last_kernel(%arg0: i32, %arg1: memref<16x128xbf16, #tpu.memory_space<vmem>>, %arg2: memref<16x1xf32, #tpu.memory_space<vmem>>, %arg3: memref<2x1x128xf32, #tpu.memory_space<vmem>>, %arg4: memref<2x1x128xf32, #tpu.memory_space<vmem>>, %arg5: memref<128x128xbf16, #tpu.memory_space<vmem>>, %arg6: memref<1x128xf32, #tpu.memory_space<vmem>>, %arg7: memref<16x128xf32, #tpu.memory_space<vmem>>) attributes {dimension_semantics = [#tpu.dimension_semantics<parallel>], iteration_bounds = array<i64: 2>, scalar_prefetch = 0 : i64, scratch_operands = 0 : i64, tpu.core_type = #tpu.core_type<tc>, window_params = [{transform_indices = @transform_0, window_bounds = array<i64: 16, 128>}, {transform_indices = @transform_1, window_bounds = array<i64: 16, 1>}, {pipeline_mode = #tpu.pipeline_mode<synchronous>, transform_indices = @transform_2, window_bounds = array<i64: 2, 1, 128>}, {pipeline_mode = #tpu.pipeline_mode<synchronous>, transform_indices = @transform_3, window_bounds = array<i64: 2, 1, 128>}, {pipeline_mode = #tpu.pipeline_mode<synchronous>, transform_indices = @transform_4, window_bounds = array<i64: 128, 128>}, {pipeline_mode = #tpu.pipeline_mode<synchronous>, transform_indices = @transform_5, window_bounds = array<i64: 1, 128>}, {transform_indices = @transform_6, window_bounds = array<i64: 16, 128>}]} {
    %c0 = arith.constant 0 : index
    %c0_0 = arith.constant 0 : index
    %c0_1 = arith.constant 0 : index
    %0 = vector.load %arg3[%c0, %c0_0, %c0_1] : memref<2x1x128xf32, #tpu.memory_space<vmem>>, vector<2x1x128xf32>
    %cst = arith.constant dense<0.000000e+00> : vector<1x128xf32>
    %1 = vector.multi_reduction <add>, %0, %cst [0] : vector<2x1x128xf32> to vector<1x128xf32>
    %cst_2 = arith.constant 6.250000e-02 : f32
    %2 = vector.broadcast %cst_2 : f32 to vector<1x128xf32>
    %3 = arith.mulf %1, %2 : vector<1x128xf32>
    %c0_3 = arith.constant 0 : index
    %c0_4 = arith.constant 0 : index
    %c0_5 = arith.constant 0 : index
    %4 = vector.load %arg4[%c0_3, %c0_4, %c0_5] : memref<2x1x128xf32, #tpu.memory_space<vmem>>, vector<2x1x128xf32>
    %cst_6 = arith.constant dense<0.000000e+00> : vector<1x128xf32>
    %5 = vector.multi_reduction <add>, %4, %cst_6 [0] : vector<2x1x128xf32> to vector<1x128xf32>
    %cst_7 = arith.constant 6.250000e-02 : f32
    %6 = vector.broadcast %cst_7 : f32 to vector<1x128xf32>
    %7 = arith.mulf %5, %6 : vector<1x128xf32>
    %8 = arith.mulf %3, %3 : vector<1x128xf32>
    %9 = arith.subf %7, %8 : vector<1x128xf32>
    %cst_8 = arith.constant 0.000000e+00 : f32
    %10 = vector.broadcast %cst_8 : f32 to vector<1x128xf32>
    %11 = arith.maximumf %9, %10 : vector<1x128xf32>
    %cst_9 = arith.constant 9.99999974E-6 : f32
    %12 = vector.broadcast %cst_9 : f32 to vector<1x128xf32>
    %13 = arith.addf %11, %12 : vector<1x128xf32>
    %14 = math.rsqrt %13 : vector<1x128xf32>
    %c0_10 = arith.constant 0 : index
    %c0_11 = arith.constant 0 : index
    %15 = vector.load %arg1[%c0_10, %c0_11] : memref<16x128xbf16, #tpu.memory_space<vmem>>, vector<16x128xbf16>
    %16 = arith.extf %15 : vector<16x128xbf16> to vector<16x128xf32>
    %17 = vector.broadcast %3 : vector<1x128xf32> to vector<16x128xf32>
    %18 = arith.subf %16, %17 : vector<16x128xf32>
    %19 = vector.broadcast %14 : vector<1x128xf32> to vector<16x128xf32>
    %20 = arith.mulf %18, %19 : vector<16x128xf32>
    %cst_12 = arith.constant 0.000000e+00 : f32
    %21 = vector.broadcast %cst_12 : f32 to vector<16x128xf32>
    %22 = arith.maximumf %20, %21 : vector<16x128xf32>
    %c0_13 = arith.constant 0 : index
    %c0_14 = arith.constant 0 : index
    %23 = vector.load %arg2[%c0_13, %c0_14] : memref<16x1xf32, #tpu.memory_space<vmem>>, vector<16x1xf32>
    %24 = vector.broadcast %23 : vector<16x1xf32> to vector<16x128xf32>
    %25 = arith.mulf %22, %24 : vector<16x128xf32>
    %26 = arith.truncf %25 : vector<16x128xf32> to vector<16x128xbf16>
    %c0_15 = arith.constant 0 : index
    %c0_16 = arith.constant 0 : index
    %27 = vector.load %arg5[%c0_15, %c0_16] : memref<128x128xbf16, #tpu.memory_space<vmem>>, vector<128x128xbf16>
    %cst_17 = arith.constant dense<0.000000e+00> : vector<16x128xf32>
    %28 = tpu.matmul %26, %27, %cst_17 {dimension_numbers = #tpu.dot_dimension_numbers<[1], [0], [0], [1], [0, 0, 1, 1], [], []>} : vector<16x128xbf16>, vector<128x128xbf16>, vector<16x128xf32> -> vector<16x128xf32>
    %c0_18 = arith.constant 0 : index
    %c0_19 = arith.constant 0 : index
    %29 = vector.load %arg6[%c0_18, %c0_19] : memref<1x128xf32, #tpu.memory_space<vmem>>, vector<1x128xf32>
    %30 = vector.broadcast %29 : vector<1x128xf32> to vector<16x128xf32>
    %31 = arith.addf %28, %30 : vector<16x128xf32>
    %c0_20 = arith.constant 0 : index
    %c0_21 = arith.constant 0 : index
    %32 = vector.load %arg7[%c0_20, %c0_21] : memref<16x128xf32, #tpu.memory_space<vmem>>, vector<16x128xf32>
    tpu.vector_store %arg7[%c0_20, %c0_21], %31 {strides = array<i32>} : memref<16x128xf32, #tpu.memory_space<vmem>>, vector<16x128xf32>,
    return
  }
  func.func @transform_0(%arg0: i32) -> (i32, i32) {
    %c0_i32 = arith.constant 0 : i32
    %c0_i32_0 = arith.constant 0 : i32
    return %arg0, %c0_i32 : i32, i32
  }
  func.func @transform_1(%arg0: i32) -> (i32, i32) {
    %c0_i32 = arith.constant 0 : i32
    %c0_i32_0 = arith.constant 0 : i32
    return %arg0, %c0_i32 : i32, i32
  }
  func.func @transform_2(%arg0: i32) -> (i32, i32, i32) {
    %c0_i32 = arith.constant 0 : i32
    %c0_i32_0 = arith.constant 0 : i32
    %c0_i32_1 = arith.constant 0 : i32
    %c0_i32_2 = arith.constant 0 : i32
    return %c0_i32, %c0_i32_0, %c0_i32_1 : i32, i32, i32
  }
  func.func @transform_3(%arg0: i32) -> (i32, i32, i32) {
    %c0_i32 = arith.constant 0 : i32
    %c0_i32_0 = arith.constant 0 : i32
    %c0_i32_1 = arith.constant 0 : i32
    %c0_i32_2 = arith.constant 0 : i32
    return %c0_i32, %c0_i32_0, %c0_i32_1 : i32, i32, i32
  }
  func.func @transform_4(%arg0: i32) -> (i32, i32) {
    %c0_i32 = arith.constant 0 : i32
    %c0_i32_0 = arith.constant 0 : i32
    %c0_i32_1 = arith.constant 0 : i32
    return %c0_i32, %c0_i32_0 : i32, i32
  }
  func.func @transform_5(%arg0: i32) -> (i32, i32) {
    %c0_i32 = arith.constant 0 : i32
    %c0_i32_0 = arith.constant 0 : i32
    %c0_i32_1 = arith.constant 0 : i32
    return %c0_i32, %c0_i32_0 : i32, i32
  }
  func.func @transform_6(%arg0: i32) -> (i32, i32) {
    %c0_i32 = arith.constant 0 : i32
    %c0_i32_0 = arith.constant 0 : i32
    return %arg0, %c0_i32 : i32, i32
  }
}

module attributes {stable_mosaic.version = 11 : i64} {
  func.func @_mid_kernel(%arg0: i32, %arg1: i32, %arg2: memref<16x128xbf16, #tpu.memory_space<vmem>>, %arg3: memref<16x1xf32, #tpu.memory_space<vmem>>, %arg4: memref<2x1x128xf32, #tpu.memory_space<vmem>>, %arg5: memref<2x1x128xf32, #tpu.memory_space<vmem>>, %arg6: memref<128x128xbf16, #tpu.memory_space<vmem>>, %arg7: memref<16x128xbf16, #tpu.memory_space<vmem>>, %arg8: memref<1x1x128xf32, #tpu.memory_space<vmem>>, %arg9: memref<1x1x128xf32, #tpu.memory_space<vmem>>) attributes {dimension_semantics = [#tpu.dimension_semantics<parallel>, #tpu.dimension_semantics<arbitrary>], iteration_bounds = array<i64: 2, 1>, scalar_prefetch = 0 : i64, scratch_operands = 0 : i64, tpu.core_type = #tpu.core_type<tc>, window_params = [{transform_indices = @transform_0, window_bounds = array<i64: 16, 128>}, {transform_indices = @transform_1, window_bounds = array<i64: 16, 1>}, {pipeline_mode = #tpu.pipeline_mode<synchronous>, transform_indices = @transform_2, window_bounds = array<i64: 2, 1, 128>}, {pipeline_mode = #tpu.pipeline_mode<synchronous>, transform_indices = @transform_3, window_bounds = array<i64: 2, 1, 128>}, {pipeline_mode = #tpu.pipeline_mode<synchronous>, transform_indices = @transform_4, window_bounds = array<i64: 128, 128>}, {transform_indices = @transform_5, window_bounds = array<i64: 16, 128>}, {transform_indices = @transform_6, window_bounds = array<i64: 1, 1, 128>}, {transform_indices = @transform_7, window_bounds = array<i64: 1, 1, 128>}]} {
    %c0_i32 = arith.constant 0 : i32
    %0 = arith.cmpi eq, %arg1, %c0_i32 : i32
    %1 = arith.extui %0 : i1 to i32
    %c0_i32_0 = arith.constant 0 : i32
    %2 = arith.cmpi ne, %1, %c0_i32_0 : i32
    scf.if %2 {
      %cst_35 = arith.constant 0.000000e+00 : f32
      %47 = vector.broadcast %cst_35 : f32 to vector<1x1x128xf32>
      %c0_36 = arith.constant 0 : index
      %c0_37 = arith.constant 0 : index
      %c0_38 = arith.constant 0 : index
      %48 = vector.load %arg8[%c0_36, %c0_37, %c0_38] : memref<1x1x128xf32, #tpu.memory_space<vmem>>, vector<1x1x128xf32>
      tpu.vector_store %arg8[%c0_36, %c0_37, %c0_38], %47 {strides = array<i32>} : memref<1x1x128xf32, #tpu.memory_space<vmem>>, vector<1x1x128xf32>,
      %cst_39 = arith.constant 0.000000e+00 : f32
      %49 = vector.broadcast %cst_39 : f32 to vector<1x1x128xf32>
      %c0_40 = arith.constant 0 : index
      %c0_41 = arith.constant 0 : index
      %c0_42 = arith.constant 0 : index
      %50 = vector.load %arg9[%c0_40, %c0_41, %c0_42] : memref<1x1x128xf32, #tpu.memory_space<vmem>>, vector<1x1x128xf32>
      tpu.vector_store %arg9[%c0_40, %c0_41, %c0_42], %49 {strides = array<i32>} : memref<1x1x128xf32, #tpu.memory_space<vmem>>, vector<1x1x128xf32>,
    } else {
    }
    %c0 = arith.constant 0 : index
    %c0_1 = arith.constant 0 : index
    %c0_2 = arith.constant 0 : index
    %3 = vector.load %arg4[%c0, %c0_1, %c0_2] : memref<2x1x128xf32, #tpu.memory_space<vmem>>, vector<2x1x128xf32>
    %cst = arith.constant dense<0.000000e+00> : vector<1x128xf32>
    %4 = vector.multi_reduction <add>, %3, %cst [0] : vector<2x1x128xf32> to vector<1x128xf32>
    %cst_3 = arith.constant 6.250000e-02 : f32
    %5 = vector.broadcast %cst_3 : f32 to vector<1x128xf32>
    %6 = arith.mulf %4, %5 : vector<1x128xf32>
    %c0_4 = arith.constant 0 : index
    %c0_5 = arith.constant 0 : index
    %c0_6 = arith.constant 0 : index
    %7 = vector.load %arg5[%c0_4, %c0_5, %c0_6] : memref<2x1x128xf32, #tpu.memory_space<vmem>>, vector<2x1x128xf32>
    %cst_7 = arith.constant dense<0.000000e+00> : vector<1x128xf32>
    %8 = vector.multi_reduction <add>, %7, %cst_7 [0] : vector<2x1x128xf32> to vector<1x128xf32>
    %cst_8 = arith.constant 6.250000e-02 : f32
    %9 = vector.broadcast %cst_8 : f32 to vector<1x128xf32>
    %10 = arith.mulf %8, %9 : vector<1x128xf32>
    %11 = arith.mulf %6, %6 : vector<1x128xf32>
    %12 = arith.subf %10, %11 : vector<1x128xf32>
    %cst_9 = arith.constant 0.000000e+00 : f32
    %13 = vector.broadcast %cst_9 : f32 to vector<1x128xf32>
    %14 = arith.maximumf %12, %13 : vector<1x128xf32>
    %cst_10 = arith.constant 9.99999974E-6 : f32
    %15 = vector.broadcast %cst_10 : f32 to vector<1x128xf32>
    %16 = arith.addf %14, %15 : vector<1x128xf32>
    %17 = math.rsqrt %16 : vector<1x128xf32>
    %c0_11 = arith.constant 0 : index
    %c0_12 = arith.constant 0 : index
    %18 = vector.load %arg2[%c0_11, %c0_12] : memref<16x128xbf16, #tpu.memory_space<vmem>>, vector<16x128xbf16>
    %19 = arith.extf %18 : vector<16x128xbf16> to vector<16x128xf32>
    %20 = vector.broadcast %6 : vector<1x128xf32> to vector<16x128xf32>
    %21 = arith.subf %19, %20 : vector<16x128xf32>
    %22 = vector.broadcast %17 : vector<1x128xf32> to vector<16x128xf32>
    %23 = arith.mulf %21, %22 : vector<16x128xf32>
    %cst_13 = arith.constant 0.000000e+00 : f32
    %24 = vector.broadcast %cst_13 : f32 to vector<16x128xf32>
    %25 = arith.maximumf %23, %24 : vector<16x128xf32>
    %c0_14 = arith.constant 0 : index
    %c0_15 = arith.constant 0 : index
    %26 = vector.load %arg3[%c0_14, %c0_15] : memref<16x1xf32, #tpu.memory_space<vmem>>, vector<16x1xf32>
    %27 = vector.broadcast %26 : vector<16x1xf32> to vector<16x128xf32>
    %28 = arith.mulf %25, %27 : vector<16x128xf32>
    %29 = arith.truncf %28 : vector<16x128xf32> to vector<16x128xbf16>
    %c0_16 = arith.constant 0 : index
    %c0_17 = arith.constant 0 : index
    %30 = vector.load %arg6[%c0_16, %c0_17] : memref<128x128xbf16, #tpu.memory_space<vmem>>, vector<128x128xbf16>
    %cst_18 = arith.constant dense<0.000000e+00> : vector<16x128xf32>
    %31 = tpu.matmul %29, %30, %cst_18 {dimension_numbers = #tpu.dot_dimension_numbers<[1], [0], [0], [1], [0, 0, 1, 1], [], []>} : vector<16x128xbf16>, vector<128x128xbf16>, vector<16x128xf32> -> vector<16x128xf32>
    %c0_19 = arith.constant 0 : index
    %c0_20 = arith.constant 0 : index
    %c0_21 = arith.constant 0 : index
    %32 = vector.load %arg8[%c0_19, %c0_20, %c0_21] : memref<1x1x128xf32, #tpu.memory_space<vmem>>, vector<1x1x128xf32>
    %cst_22 = arith.constant dense<0.000000e+00> : vector<128xf32>
    %33 = vector.multi_reduction <add>, %31, %cst_22 [0] : vector<16x128xf32> to vector<128xf32>
    %34 = vector.shape_cast %33 : vector<128xf32> to vector<1x128xf32>
    %35 = vector.shape_cast %34 : vector<1x128xf32> to vector<1x1x128xf32>
    %36 = arith.addf %32, %35 : vector<1x1x128xf32>
    %c0_23 = arith.constant 0 : index
    %c0_24 = arith.constant 0 : index
    %c0_25 = arith.constant 0 : index
    %37 = vector.load %arg8[%c0_23, %c0_24, %c0_25] : memref<1x1x128xf32, #tpu.memory_space<vmem>>, vector<1x1x128xf32>
    tpu.vector_store %arg8[%c0_23, %c0_24, %c0_25], %36 {strides = array<i32>} : memref<1x1x128xf32, #tpu.memory_space<vmem>>, vector<1x1x128xf32>,
    %c0_26 = arith.constant 0 : index
    %c0_27 = arith.constant 0 : index
    %c0_28 = arith.constant 0 : index
    %38 = vector.load %arg9[%c0_26, %c0_27, %c0_28] : memref<1x1x128xf32, #tpu.memory_space<vmem>>, vector<1x1x128xf32>
    %39 = arith.mulf %31, %31 : vector<16x128xf32>
    %cst_29 = arith.constant dense<0.000000e+00> : vector<128xf32>
    %40 = vector.multi_reduction <add>, %39, %cst_29 [0] : vector<16x128xf32> to vector<128xf32>
    %41 = vector.shape_cast %40 : vector<128xf32> to vector<1x128xf32>
    %42 = vector.shape_cast %41 : vector<1x128xf32> to vector<1x1x128xf32>
    %43 = arith.addf %38, %42 : vector<1x1x128xf32>
    %c0_30 = arith.constant 0 : index
    %c0_31 = arith.constant 0 : index
    %c0_32 = arith.constant 0 : index
    %44 = vector.load %arg9[%c0_30, %c0_31, %c0_32] : memref<1x1x128xf32, #tpu.memory_space<vmem>>, vector<1x1x128xf32>
    tpu.vector_store %arg9[%c0_30, %c0_31, %c0_32], %43 {strides = array<i32>} : memref<1x1x128xf32, #tpu.memory_space<vmem>>, vector<1x1x128xf32>,
    %45 = arith.truncf %31 : vector<16x128xf32> to vector<16x128xbf16>
    %c0_33 = arith.constant 0 : index
    %c0_34 = arith.constant 0 : index
    %46 = vector.load %arg7[%c0_33, %c0_34] : memref<16x128xbf16, #tpu.memory_space<vmem>>, vector<16x128xbf16>
    tpu.vector_store %arg7[%c0_33, %c0_34], %45 {strides = array<i32>} : memref<16x128xbf16, #tpu.memory_space<vmem>>, vector<16x128xbf16>,
    return
  }
  func.func @transform_0(%arg0: i32, %arg1: i32) -> (i32, i32) {
    %c1_i32 = arith.constant 1 : i32
    %0 = arith.muli %arg0, %c1_i32 : i32
    %1 = arith.addi %0, %arg1 : i32
    %c0_i32 = arith.constant 0 : i32
    %c0_i32_0 = arith.constant 0 : i32
    return %1, %c0_i32 : i32, i32
  }
  func.func @transform_1(%arg0: i32, %arg1: i32) -> (i32, i32) {
    %c1_i32 = arith.constant 1 : i32
    %0 = arith.muli %arg0, %c1_i32 : i32
    %1 = arith.addi %0, %arg1 : i32
    %c0_i32 = arith.constant 0 : i32
    %c0_i32_0 = arith.constant 0 : i32
    return %1, %c0_i32 : i32, i32
  }
  func.func @transform_2(%arg0: i32, %arg1: i32) -> (i32, i32, i32) {
    %c0_i32 = arith.constant 0 : i32
    %c0_i32_0 = arith.constant 0 : i32
    %c0_i32_1 = arith.constant 0 : i32
    %c0_i32_2 = arith.constant 0 : i32
    return %c0_i32, %c0_i32_0, %c0_i32_1 : i32, i32, i32
  }
  func.func @transform_3(%arg0: i32, %arg1: i32) -> (i32, i32, i32) {
    %c0_i32 = arith.constant 0 : i32
    %c0_i32_0 = arith.constant 0 : i32
    %c0_i32_1 = arith.constant 0 : i32
    %c0_i32_2 = arith.constant 0 : i32
    return %c0_i32, %c0_i32_0, %c0_i32_1 : i32, i32, i32
  }
  func.func @transform_4(%arg0: i32, %arg1: i32) -> (i32, i32) {
    %c0_i32 = arith.constant 0 : i32
    %c0_i32_0 = arith.constant 0 : i32
    %c0_i32_1 = arith.constant 0 : i32
    return %c0_i32, %c0_i32_0 : i32, i32
  }
  func.func @transform_5(%arg0: i32, %arg1: i32) -> (i32, i32) {
    %c1_i32 = arith.constant 1 : i32
    %0 = arith.muli %arg0, %c1_i32 : i32
    %1 = arith.addi %0, %arg1 : i32
    %c0_i32 = arith.constant 0 : i32
    %c0_i32_0 = arith.constant 0 : i32
    return %1, %c0_i32 : i32, i32
  }
  func.func @transform_6(%arg0: i32, %arg1: i32) -> (i32, i32, i32) {
    %c0_i32 = arith.constant 0 : i32
    %c0_i32_0 = arith.constant 0 : i32
    %c0_i32_1 = arith.constant 0 : i32
    return %arg0, %c0_i32, %c0_i32_0 : i32, i32, i32
  }
  func.func @transform_7(%arg0: i32, %arg1: i32) -> (i32, i32, i32) {
    %c0_i32 = arith.constant 0 : i32
    %c0_i32_0 = arith.constant 0 : i32
    %c0_i32_1 = arith.constant 0 : i32
    return %arg0, %c0_i32, %c0_i32_0 : i32, i32, i32
  }
}

module attributes {stable_mosaic.version = 11 : i64} {
  func.func @_first_kernel(%arg0: i32, %arg1: i32, %arg2: memref<16x128xbf16, #tpu.memory_space<vmem>>, %arg3: memref<128x128xbf16, #tpu.memory_space<vmem>>, %arg4: memref<16x128xbf16, #tpu.memory_space<vmem>>, %arg5: memref<1x1x128xf32, #tpu.memory_space<vmem>>, %arg6: memref<1x1x128xf32, #tpu.memory_space<vmem>>) attributes {dimension_semantics = [#tpu.dimension_semantics<parallel>, #tpu.dimension_semantics<arbitrary>], iteration_bounds = array<i64: 2, 1>, scalar_prefetch = 0 : i64, scratch_operands = 0 : i64, tpu.core_type = #tpu.core_type<tc>, window_params = [{transform_indices = @transform_0, window_bounds = array<i64: 16, 128>}, {pipeline_mode = #tpu.pipeline_mode<synchronous>, transform_indices = @transform_1, window_bounds = array<i64: 128, 128>}, {transform_indices = @transform_2, window_bounds = array<i64: 16, 128>}, {transform_indices = @transform_3, window_bounds = array<i64: 1, 1, 128>}, {transform_indices = @transform_4, window_bounds = array<i64: 1, 1, 128>}]} {
    %c0_i32 = arith.constant 0 : i32
    %0 = arith.cmpi eq, %arg1, %c0_i32 : i32
    %1 = arith.extui %0 : i1 to i32
    %c0_i32_0 = arith.constant 0 : i32
    %2 = arith.cmpi ne, %1, %c0_i32_0 : i32
    scf.if %2 {
      %cst_20 = arith.constant 0.000000e+00 : f32
      %21 = vector.broadcast %cst_20 : f32 to vector<1x1x128xf32>
      %c0_21 = arith.constant 0 : index
      %c0_22 = arith.constant 0 : index
      %c0_23 = arith.constant 0 : index
      %22 = vector.load %arg5[%c0_21, %c0_22, %c0_23] : memref<1x1x128xf32, #tpu.memory_space<vmem>>, vector<1x1x128xf32>
      tpu.vector_store %arg5[%c0_21, %c0_22, %c0_23], %21 {strides = array<i32>} : memref<1x1x128xf32, #tpu.memory_space<vmem>>, vector<1x1x128xf32>,
      %cst_24 = arith.constant 0.000000e+00 : f32
      %23 = vector.broadcast %cst_24 : f32 to vector<1x1x128xf32>
      %c0_25 = arith.constant 0 : index
      %c0_26 = arith.constant 0 : index
      %c0_27 = arith.constant 0 : index
      %24 = vector.load %arg6[%c0_25, %c0_26, %c0_27] : memref<1x1x128xf32, #tpu.memory_space<vmem>>, vector<1x1x128xf32>
      tpu.vector_store %arg6[%c0_25, %c0_26, %c0_27], %23 {strides = array<i32>} : memref<1x1x128xf32, #tpu.memory_space<vmem>>, vector<1x1x128xf32>,
    } else {
    }
    %c0 = arith.constant 0 : index
    %c0_1 = arith.constant 0 : index
    %3 = vector.load %arg2[%c0, %c0_1] : memref<16x128xbf16, #tpu.memory_space<vmem>>, vector<16x128xbf16>
    %c0_2 = arith.constant 0 : index
    %c0_3 = arith.constant 0 : index
    %4 = vector.load %arg3[%c0_2, %c0_3] : memref<128x128xbf16, #tpu.memory_space<vmem>>, vector<128x128xbf16>
    %cst = arith.constant dense<0.000000e+00> : vector<16x128xf32>
    %5 = tpu.matmul %3, %4, %cst {dimension_numbers = #tpu.dot_dimension_numbers<[1], [0], [0], [1], [0, 0, 1, 1], [], []>} : vector<16x128xbf16>, vector<128x128xbf16>, vector<16x128xf32> -> vector<16x128xf32>
    %c0_4 = arith.constant 0 : index
    %c0_5 = arith.constant 0 : index
    %c0_6 = arith.constant 0 : index
    %6 = vector.load %arg5[%c0_4, %c0_5, %c0_6] : memref<1x1x128xf32, #tpu.memory_space<vmem>>, vector<1x1x128xf32>
    %cst_7 = arith.constant dense<0.000000e+00> : vector<128xf32>
    %7 = vector.multi_reduction <add>, %5, %cst_7 [0] : vector<16x128xf32> to vector<128xf32>
    %8 = vector.shape_cast %7 : vector<128xf32> to vector<1x128xf32>
    %9 = vector.shape_cast %8 : vector<1x128xf32> to vector<1x1x128xf32>
    %10 = arith.addf %6, %9 : vector<1x1x128xf32>
    %c0_8 = arith.constant 0 : index
    %c0_9 = arith.constant 0 : index
    %c0_10 = arith.constant 0 : index
    %11 = vector.load %arg5[%c0_8, %c0_9, %c0_10] : memref<1x1x128xf32, #tpu.memory_space<vmem>>, vector<1x1x128xf32>
    tpu.vector_store %arg5[%c0_8, %c0_9, %c0_10], %10 {strides = array<i32>} : memref<1x1x128xf32, #tpu.memory_space<vmem>>, vector<1x1x128xf32>,
    %c0_11 = arith.constant 0 : index
    %c0_12 = arith.constant 0 : index
    %c0_13 = arith.constant 0 : index
    %12 = vector.load %arg6[%c0_11, %c0_12, %c0_13] : memref<1x1x128xf32, #tpu.memory_space<vmem>>, vector<1x1x128xf32>
    %13 = arith.mulf %5, %5 : vector<16x128xf32>
    %cst_14 = arith.constant dense<0.000000e+00> : vector<128xf32>
    %14 = vector.multi_reduction <add>, %13, %cst_14 [0] : vector<16x128xf32> to vector<128xf32>
    %15 = vector.shape_cast %14 : vector<128xf32> to vector<1x128xf32>
    %16 = vector.shape_cast %15 : vector<1x128xf32> to vector<1x1x128xf32>
    %17 = arith.addf %12, %16 : vector<1x1x128xf32>
    %c0_15 = arith.constant 0 : index
    %c0_16 = arith.constant 0 : index
    %c0_17 = arith.constant 0 : index
    %18 = vector.load %arg6[%c0_15, %c0_16, %c0_17] : memref<1x1x128xf32, #tpu.memory_space<vmem>>, vector<1x1x128xf32>
    tpu.vector_store %arg6[%c0_15, %c0_16, %c0_17], %17 {strides = array<i32>} : memref<1x1x128xf32, #tpu.memory_space<vmem>>, vector<1x1x128xf32>,
    %19 = arith.truncf %5 : vector<16x128xf32> to vector<16x128xbf16>
    %c0_18 = arith.constant 0 : index
    %c0_19 = arith.constant 0 : index
    %20 = vector.load %arg4[%c0_18, %c0_19] : memref<16x128xbf16, #tpu.memory_space<vmem>>, vector<16x128xbf16>
    tpu.vector_store %arg4[%c0_18, %c0_19], %19 {strides = array<i32>} : memref<16x128xbf16, #tpu.memory_space<vmem>>, vector<16x128xbf16>,
    return
  }
  func.func @transform_0(%arg0: i32, %arg1: i32) -> (i32, i32) {
    %c1_i32 = arith.constant 1 : i32
    %0 = arith.muli %arg0, %c1_i32 : i32
    %1 = arith.addi %0, %arg1 : i32
    %c0_i32 = arith.constant 0 : i32
    %c0_i32_0 = arith.constant 0 : i32
    return %1, %c0_i32 : i32, i32
  }
  func.func @transform_1(%arg0: i32, %arg1: i32) -> (i32, i32) {
    %c0_i32 = arith.constant 0 : i32
    %c0_i32_0 = arith.constant 0 : i32
    %c0_i32_1 = arith.constant 0 : i32
    return %c0_i32, %c0_i32_0 : i32, i32
  }
  func.func @transform_2(%arg0: i32, %arg1: i32) -> (i32, i32) {
    %c1_i32 = arith.constant 1 : i32
    %0 = arith.muli %arg0, %c1_i32 : i32
    %1 = arith.addi %0, %arg1 : i32
    %c0_i32 = arith.constant 0 : i32
    %c0_i32_0 = arith.constant 0 : i32
    return %1, %c0_i32 : i32, i32
  }
  func.func @transform_3(%arg0: i32, %arg1: i32) -> (i32, i32, i32) {
    %c0_i32 = arith.constant 0 : i32
    %c0_i32_0 = arith.constant 0 : i32
    %c0_i32_1 = arith.constant 0 : i32
    return %arg0, %c0_i32, %c0_i32_0 : i32, i32, i32
  }
  func.func @transform_4(%arg0: i32, %arg1: i32) -> (i32, i32, i32) {
    %c0_i32 = arith.constant 0 : i32
    %c0_i32_0 = arith.constant 0 : i32
    %c0_i32_1 = arith.constant 0 : i32
    return %arg0, %c0_i32, %c0_i32_0 : i32, i32, i32
  }
}

</mosaic_0001>

<llo_original>
// kernel: _mpnn_forward_padded.3
$region0: #{_mpnn_forward_padded.3}
  #allocation0 [shape = 'u32[]', space=smem, size = 0x4, offset = 0x4, fixed_abs, tag = 'smem constant byte address 0x4 - core index']
  #allocation1 [shape = 'u32[72,128]{1,0:T(1,128)}', space=vmem, size = 0x9000, scoped, tag = 'internal scratch']
  %s0 = inlined_call_operand.hbm [shape: bf16[32,128], index: 0, kind: input, shape index: {}]
  %s1 = inlined_call_operand.hbm [shape: bf16[128,128], index: 1, kind: input, shape index: {}]
  %s2 = inlined_call_operand.vmem [shape: bf16[32,128], index: 2, kind: output, shape index: {0}]
  %s3 = inlined_call_operand.vmem [shape: f32[2,1,128], index: 3, kind: output, shape index: {1}]
  %s4 = inlined_call_operand.vmem [shape: f32[2,1,128], index: 4, kind: output, shape index: {2}]
  %5 = xla_tuple %s2, %s3, %s4
  %s6 = sld [smem:[#allocation0]]
  $region69: #{_mpnn_forward_padded.3} parent=0
    _
  %s8 = ssub.s32 1, %s6
  %s9 = scalar_select 0, %s8, %s6
  $region1: #{_mpnn_forward_padded.3} parent=0
    #allocation2 [shape = 'u8[8192]{0}', space=vmem, size = 0x2000, scoped, tag = 'input window, operand 0']
    #allocation3 [shape = 's32[2]{0}', space=sflag, size = 0x8, scoped, tag = 'scoped memory for _mpnn_forward_padded.3']
    #allocation4 [shape = 'u8[32768]{0}', space=vmem, size = 0x8000, scoped, tag = 'input window, operand 1, single buffered']
    #allocation5 [shape = 's32[1]{0}', space=sflag, size = 0x4, scoped, tag = 'scoped memory for _mpnn_forward_padded.3']
    %10 = vsyncpa [#allocation3], 0
    %s11 = scalar_lea.sflag [#allocation3], 1
    %12 = vsyncpa %s11, 0
    %13 = vsyncpa [#allocation5], 0
    loop: start=0, step=1, limit=4
    $region2: #{_mpnn_forward_padded.3} parent=1 // loop_pre_header
      _
    $region3: #{_mpnn_forward_padded.3} parent=1 // loop_header
      %s15 = sphi 0, %s19
      %p16 = scmp.ge.s32.totalorder %s15, 4
      %s22 = sphi 0, %s34
      %s23 = sphi 0, %s30
      %s24 = sphi 0, %s22
      %s25 = sphi 0, %s23
      %s26 = sphi 0, %s24
      %s27 = sphi 0, %s25
      %s39 = sphi 0, %s41
      %s42 = sphi 0, %s39
      %s43 = sphi 0, %s42
      %s59 = sphi 0, %s43
      %s63 = sphi 0, %s63
      %s65 = sphi 0, %s63
      %s66 = sphi 0, %s65
      %s80 = sphi 0, %s66
      %s88 = sphi 0, %s90
      %s91 = sphi 0, %s88
      %s92 = sphi 0, %s91
      %s108 = sphi 0, %s92
      %s114 = sphi 0, %s116
      %s117 = sphi 0, %s114
      %s118 = sphi 0, %s117
      %s134 = sphi 0, %s118
      %s140 = sphi 0, %s142
      %s143 = sphi 0, %s140
      %s144 = sphi 0, %s143
      %s160 = sphi 0, %s144
    $region4: #{_mpnn_forward_padded.3} parent=1 // loop_header_branch
      %18 = sbr.rel (%p16) target = $region8
    $region5: #{_mpnn_forward_padded.3} parent=1 // loop_body
      %s20 = ssub.s32 %s15, 1
      %s21 = ssub.s32 %s15, 2
      %s28 = sadd.s32 1, %s23
      %p29 = scmp.ge.s32.totalorder %s28, 1
      %s30 = scalar_select %p29, 0, %s28
      %s31 = sadd.s32 1, %s22
      %s32 = scalar_select %p29, %s31, %s22
      %p33 = scmp.ge.s32.totalorder %s32, 2
      %s34 = scalar_select %p33, 0, %s32
      %s35 = sadd.s32 %s22, %s23
      %s36 = sadd.s32 %s34, %s30
      %s37 = ssub.s32 %s35, %s36
      %p38 = scmp.eq.s32.totalorder %s37, 0
      %s40 = sadd.s32 %s39, 1
      %s41 = scalar_select %p38, %s39, %s40
      %p44 = pneg %p38
      %p45 = scmp.eq.s32.totalorder %s15, 1
      %p46 = por %p44, %p45
      %p47 = scmp.ne.s32.totalorder %s39, %s42
      %p48 = scmp.eq.s32.totalorder %s15, 0
      %p49 = por %p47, %p48
      %p50 = scmp.ne.s32.totalorder %s39, %s42
      %p51 = scmp.eq.s32.totalorder %s20, 1
      %p52 = por %p50, %p51
      %p53 = scmp.ne.s32.totalorder %s42, %s43
      %p54 = scmp.eq.s32.totalorder %s20, 0
      %p55 = por %p53, %p54
      %p56 = scmp.ne.s32.totalorder %s42, %s43
      %p57 = scmp.eq.s32.totalorder %s21, 1
      %p58 = por %p56, %p57
      %p60 = scmp.ne.s32.totalorder %s43, %s59
      %p61 = scmp.eq.s32.totalorder %s21, 0
      %p62 = por %p60, %p61
      %s64 = sadd.s32 %s63, 1
      %p67 = scmp.eq.s32.totalorder %s15, 1
      %p68 = scmp.ne.s32.totalorder %s63, %s65
      %p69 = scmp.eq.s32.totalorder %s15, 0
      %p70 = por %p68, %p69
      %p71 = scmp.ne.s32.totalorder %s63, %s65
      %p72 = scmp.eq.s32.totalorder %s20, 1
      %p73 = por %p71, %p72
      %p74 = scmp.ne.s32.totalorder %s65, %s66
      %p75 = scmp.eq.s32.totalorder %s20, 0
      %p76 = por %p74, %p75
      %p77 = scmp.ne.s32.totalorder %s65, %s66
      %p78 = scmp.eq.s32.totalorder %s21, 1
      %p79 = por %p77, %p78
      %p81 = scmp.ne.s32.totalorder %s66, %s80
      %p82 = scmp.eq.s32.totalorder %s21, 0
      %p83 = por %p81, %p82
      %s84 = sadd.s32 %s22, %s23
      %s85 = sadd.s32 %s34, %s30
      %s86 = ssub.s32 %s84, %s85
      %p87 = scmp.eq.s32.totalorder %s86, 0
      %s89 = sadd.s32 %s88, 1
      %s90 = scalar_select %p87, %s88, %s89
      %p93 = pneg %p87
      %p94 = scmp.eq.s32.totalorder %s15, 1
      %p95 = por %p93, %p94
      %p96 = scmp.ne.s32.totalorder %s88, %s91
      %p97 = scmp.eq.s32.totalorder %s15, 0
      %p98 = por %p96, %p97
      %p99 = scmp.ne.s32.totalorder %s88, %s91
      %p100 = scmp.eq.s32.totalorder %s20, 1
      %p101 = por %p99, %p100
      %p102 = scmp.ne.s32.totalorder %s91, %s92
      %p103 = scmp.eq.s32.totalorder %s20, 0
      %p104 = por %p102, %p103
      %p105 = scmp.ne.s32.totalorder %s91, %s92
      %p106 = scmp.eq.s32.totalorder %s21, 1
      %p107 = por %p105, %p106
      %p109 = scmp.ne.s32.totalorder %s92, %s108
      %p110 = scmp.eq.s32.totalorder %s21, 0
      %p111 = por %p109, %p110
      %s112 = ssub.s32 %s22, %s34
      %p113 = scmp.eq.s32.totalorder %s112, 0
      %s115 = sadd.s32 %s114, 1
      %s116 = scalar_select %p113, %s114, %s115
      %p119 = pneg %p113
      %p120 = scmp.eq.s32.totalorder %s15, 1
      %p121 = por %p119, %p120
      %p122 = scmp.ne.s32.totalorder %s114, %s117
      %p123 = scmp.eq.s32.totalorder %s15, 0
      %p124 = por %p122, %p123
      %p125 = scmp.ne.s32.totalorder %s114, %s117
      %p126 = scmp.eq.s32.totalorder %s20, 1
      %p127 = por %p125, %p126
      %p128 = scmp.ne.s32.totalorder %s117, %s118
      %p129 = scmp.eq.s32.totalorder %s20, 0
      %p130 = por %p128, %p129
      %p131 = scmp.ne.s32.totalorder %s117, %s118
      %p132 = scmp.eq.s32.totalorder %s21, 1
      %p133 = por %p131, %p132
      %p135 = scmp.ne.s32.totalorder %s118, %s134
      %p136 = scmp.eq.s32.totalorder %s21, 0
      %p137 = por %p135, %p136
      %s138 = ssub.s32 %s22, %s34
      %p139 = scmp.eq.s32.totalorder %s138, 0
      %s141 = sadd.s32 %s140, 1
      %s142 = scalar_select %p139, %s140, %s141
      %p145 = pneg %p139
      %p146 = scmp.eq.s32.totalorder %s15, 1
      %p147 = por %p145, %p146
      %p148 = scmp.ne.s32.totalorder %s140, %s143
      %p149 = scmp.eq.s32.totalorder %s15, 0
      %p150 = por %p148, %p149
      %p151 = scmp.ne.s32.totalorder %s140, %s143
      %p152 = scmp.eq.s32.totalorder %s20, 1
      %p153 = por %p151, %p152
      %p154 = scmp.ne.s32.totalorder %s143, %s144
      %p155 = scmp.eq.s32.totalorder %s20, 0
      %p156 = por %p154, %p155
      %p157 = scmp.ne.s32.totalorder %s143, %s144
      %p158 = scmp.eq.s32.totalorder %s21, 1
      %p159 = por %p157, %p158
      %p161 = scmp.ne.s32.totalorder %s144, %s160
      %p162 = scmp.eq.s32.totalorder %s21, 0
      %p163 = por %p161, %p162
      %p164 = scmp.le.s32.totalorder 1, %s15
      %p165 = scmp.lt.s32.totalorder %s15, 3
      %p166 = pnand %p164, %p165
      %p167 = pneg %p166
      // Predicated region
      $region9: #{_mpnn_forward_padded.3} parent=5 // pred_check
        _
      $region10: #{_mpnn_forward_padded.3} parent=5 // pred_check_branch
        %169 = sbr.rel (%p166) target = $region12
      $region11: #{_mpnn_forward_padded.3} parent=5 // pred_region
        %s170 = ssub.s32 %s15, 1
        // Predicated region
        $region13: #{_mpnn_forward_padded.3} parent=11 // pred_check
          %p171 = pneg %p76
        $region14: #{_mpnn_forward_padded.3} parent=11 // pred_check_branch
          %173 = sbr.rel (%p171) target = $region16
        $region15: #{_mpnn_forward_padded.3} parent=11 // pred_region
          %175 = vsyncadd [#allocation5], 0
          %s176 = sshll.u32 %s1, 4
          %s177 = int_to_ptr.hbm [resolvable:$true] %s176
          %s178 = sshll.u32 [#allocation4], 4
          %s179 = int_to_ptr.vmem [resolvable:$true] %s178
          %184 = dma.hbm_to_vmem [thread:$0]  %s177, 1024, %s179, [#allocation5], 64, 64, 4
        $region16: #{_mpnn_forward_padded.3} parent=11 // pred_fallthru
          _
      $region12: #{_mpnn_forward_padded.3} parent=5 // pred_fallthru
        _
      %p185 = scmp.lt.s32.totalorder %s15, 2
      // Predicated region
      $region17: #{_mpnn_forward_padded.3} parent=5 // pred_check
        %p186 = pneg %p185
      $region18: #{_mpnn_forward_padded.3} parent=5 // pred_check_branch
        %188 = sbr.rel (%p186) target = $region20
      $region19: #{_mpnn_forward_padded.3} parent=5 // pred_region
        // Predicated region
        $region21: #{_mpnn_forward_padded.3} parent=19 // pred_check
          %p189 = pneg %p49
        $region22: #{_mpnn_forward_padded.3} parent=19 // pred_check_branch
          %191 = sbr.rel (%p189) target = $region24
        $region23: #{_mpnn_forward_padded.3} parent=19 // pred_region
          %s192 = sand.u32 %s39, 1
          %s193 = scalar_lea.sflag [#allocation3], %s192
          %s194 = sand.u32 %s39, 1
          %s195 = smul.addr %s194, 8
          %s196 = scalar_lea.vmem [#allocation2], %s195
          %s197 = sadd.s32 %s22, %s23
          %s198 = smul.u32 2, %s197
          %200 = vsyncadd %s193, 0
          %s201 = smul.addr %s198, 4
          %s202 = scalar_lea.hbm %s0, %s201
          %s203 = sshll.u32 %s202, 4
          %s204 = int_to_ptr.hbm [resolvable:$true] %s203
          %s205 = sshll.u32 %s196, 4
          %s206 = int_to_ptr.vmem [resolvable:$true] %s205
          %211 = dma.hbm_to_vmem [thread:$0]  %s204, 128, %s206, %s193, 64, 64, 4
        $region24: #{_mpnn_forward_padded.3} parent=19 // pred_fallthru
          _
      $region20: #{_mpnn_forward_padded.3} parent=5 // pred_fallthru
        _
      %p212 = scmp.le.s32.totalorder 1, %s15
      %p213 = scmp.lt.s32.totalorder %s15, 3
      %p214 = pnand %p212, %p213
      %p215 = pneg %p214
      // Predicated region
      $region25: #{_mpnn_forward_padded.3} parent=5 // pred_check
        _
      $region26: #{_mpnn_forward_padded.3} parent=5 // pred_check_branch
        %217 = sbr.rel (%p214) target = $region28
      $region27: #{_mpnn_forward_padded.3} parent=5 // pred_region
        %s218 = ssub.s32 %s15, 1
        %s219 = sand.u32 %s42, 1
        %s220 = scalar_lea.sflag [#allocation3], %s219
        %s221 = sand.u32 %s42, 1
        %s222 = smul.addr %s221, 8
        %s223 = scalar_lea.vmem [#allocation2], %s222
        // Predicated region
        $region29: #{_mpnn_forward_padded.3} parent=27 // pred_check
          %p224 = pneg %p55
        $region30: #{_mpnn_forward_padded.3} parent=27 // pred_check_branch
          %226 = sbr.rel (%p224) target = $region32
        $region31: #{_mpnn_forward_padded.3} parent=27 // pred_region
          %228 = dma.done %s220, 128
        $region32: #{_mpnn_forward_padded.3} parent=27 // pred_fallthru
          _
        // Predicated region
        $region33: #{_mpnn_forward_padded.3} parent=27 // pred_check
          %p229 = pneg %p76
        $region34: #{_mpnn_forward_padded.3} parent=27 // pred_check_branch
          %231 = sbr.rel (%p229) target = $region36
        $region35: #{_mpnn_forward_padded.3} parent=27 // pred_region
          %233 = dma.done [#allocation5], 1024
        $region36: #{_mpnn_forward_padded.3} parent=27 // pred_fallthru
          _
        %s234 = sand.u32 %s42, 1
        %s235 = scalar_lea.sflag [#allocation3], %s234
        %s236 = sand.u32 %s42, 1
        %s237 = smul.addr %s236, 8
        %s238 = scalar_lea.vmem [#allocation2], %s237
        %p239 = pneg %p55
        %p240 = pneg %p52
        %p241 = pneg %p76
        %p242 = pneg %p73
        %p243 = pneg %p104
        %p244 = pneg %p101
        %s245 = sadd.s32 %s24, %s25
        %s246 = smul.u32 2, %s245
        %p247 = scmp.lt.s32.totalorder %s246, 3
        %s248 = scalar_select %p247, %s246, 3
        %s249 = smul.addr %s248, 4
        %s250 = scalar_lea.vmem %s2, %s249
        %p251 = pneg %p130
        %p252 = pneg %p127
        %p253 = scmp.lt.s32.totalorder %s24, 1
        %s254 = scalar_select %p253, %s24, 1
        %s255 = scalar_lea.vmem %s3, %s254
        %p256 = pneg %p156
        %p257 = pneg %p153
        %p258 = scmp.lt.s32.totalorder %s24, 1
        %s259 = scalar_select %p258, %s24, 1
        %s260 = scalar_lea.vmem %s4, %s259
        %s261 = sadd.s32 %s24, %s25
        %s262 = smul.u32 2, %s261
        %s263 = sadd.s32 %s24, %s25
        %s264 = smul.u32 2, %s263
        %p265 = scmp.lt.s32.totalorder %s264, 3
        %s266 = scalar_select %p265, %s264, 3
        %s267 = smul.addr %s266, 4
        %s268 = scalar_lea.vmem %s2, %s267
        %s269 = sadd.s32 %s24, %s25
        %s270 = smul.u32 2, %s269
        %p271 = scmp.lt.s32.totalorder %s24, 1
        %s272 = scalar_select %p271, %s24, 1
        %s273 = scalar_lea.vmem %s3, %s272
        %p274 = scmp.lt.s32.totalorder %s24, 1
        %s275 = scalar_select %p274, %s24, 1
        %s276 = scalar_lea.vmem %s4, %s275
        %p277 = scmp.eq.s32.totalorder %s25, 0
        // Predicated region
        $region37: #{_mpnn_forward_padded.3} parent=27 // pred_check
          %p278 = pneg %p277
        $region38: #{_mpnn_forward_padded.3} parent=27 // pred_check_branch
          %280 = sbr.rel (%p278) target = $region40
        $region39: #{_mpnn_forward_padded.3} parent=27 // pred_region
          %281 = vst [vmem:[%s273] sm:$0x1] 0.0
          %282 = vst [vmem:[%s276] sm:$0x1] 0.0
        $region40: #{_mpnn_forward_padded.3} parent=27 // pred_fallthru
          _
        %v283 = vld [vmem:[%s223] sm:$0xf]
        %v284 = vld [vmem:[%s223 + $0x4] sm:$0xf]
        %v285 = vld [vmem:[#allocation4] sm:$0xf]
        %v286 = vld [vmem:[#allocation4 + $0x4] sm:$0xf]
        %v287 = vld [vmem:[#allocation4 + $0x8] sm:$0xf]
        %v288 = vld [vmem:[#allocation4 + $0xc] sm:$0xf]
        %v289 = vld [vmem:[#allocation4 + $0x10] sm:$0xf]
        %v290 = vld [vmem:[#allocation4 + $0x14] sm:$0xf]
        %v291 = vld [vmem:[#allocation4 + $0x18] sm:$0xf]
        %v292 = vld [vmem:[#allocation4 + $0x1c] sm:$0xf]
        %v293 = vld [vmem:[#allocation4 + $0x20] sm:$0xf]
        %v294 = vld [vmem:[#allocation4 + $0x24] sm:$0xf]
        %v295 = vld [vmem:[#allocation4 + $0x28] sm:$0xf]
        %v296 = vld [vmem:[#allocation4 + $0x2c] sm:$0xf]
        %v297 = vld [vmem:[#allocation4 + $0x30] sm:$0xf]
        %v298 = vld [vmem:[#allocation4 + $0x34] sm:$0xf]
        %v299 = vld [vmem:[#allocation4 + $0x38] sm:$0xf]
        %v300 = vld [vmem:[#allocation4 + $0x3c] sm:$0xf]
        %v303 = vunpack.c.l.b16 %v283
        %v304 = vunpack.c.l.b16 %v284
        %v305 = vpack.c.b16 %v304, %v303
        %v323 = vunpack.c.l.b16 %v285
        %v324 = vunpack.c.l.b16 %v286
        %v325 = vunpack.c.l.b16 %v287
        %v326 = vunpack.c.l.b16 %v288
        %v327 = vunpack.c.l.b16 %v289
        %v328 = vunpack.c.l.b16 %v290
        %v329 = vunpack.c.l.b16 %v291
        %v330 = vunpack.c.l.b16 %v292
        %v331 = vunpack.c.l.b16 %v293
        %v332 = vunpack.c.l.b16 %v294
        %v333 = vunpack.c.l.b16 %v295
        %v334 = vunpack.c.l.b16 %v296
        %v335 = vunpack.c.l.b16 %v297
        %v336 = vunpack.c.l.b16 %v298
        %v337 = vunpack.c.l.b16 %v299
        %v338 = vunpack.c.l.b16 %v300
        %v339 = vpack.c.b16 %v324, %v323
        %v340 = vpack.c.b16 %v326, %v325
        %v341 = vpack.c.b16 %v328, %v327
        %v342 = vpack.c.b16 %v330, %v329
        %v343 = vpack.c.b16 %v332, %v331
        %v344 = vpack.c.b16 %v334, %v333
        %v345 = vpack.c.b16 %v336, %v335
        %v346 = vpack.c.b16 %v338, %v337
        %355 = vmatpush.bf16.msra.mxu0 %v346
        %356 = vmatpush.bf16.msra.mxu0 %v345
        %357 = vmatpush.bf16.msra.mxu0 %v344
        %358 = vmatpush.bf16.msra.mxu0 %v343
        %359 = vmatpush.bf16.msra.mxu0 %v342
        %360 = vmatpush.bf16.msra.mxu0 %v341
        %361 = vmatpush.bf16.msra.mxu0 %v340
        %362 = vmatpush.bf16.msra.mxu0 %v339
        %363 = vmatmul.bf16.gmra.mxu0 %v305
        %v364 = vpop.f32.mrf.mxu0
        %v365 = vadd.f32 0.0, %v364
        %v366 = vpop.f32.mrf.mxu0
        %v367 = vadd.f32 0.0, %v366
        %368 = vdwg.mxu0
        %v369 = vld [vmem:[%s273] sm:$0x1]
        %v370 = vadd.f32 %v365, %v367
        %v371 = vrot.slane %v370, 4
        %v372 = vadd.f32 %v370, %v371
        %v373 = vrot.slane %v372, 2
        %v374 = vadd.f32 %v372, %v373
        %v375 = vrot.slane %v374, 1
        %v376 = vadd.f32 %v374, %v375
        %v377 = vadd.f32 %v369, %v376
        %378 = vst [vmem:[%s273] sm:$0x1] %v377
        %v379 = vld [vmem:[%s276] sm:$0x1]
        %v380 = vmul.f32 %v365, %v365
        %v381 = vmul.f32 %v367, %v367
        %v382 = vadd.f32 %v380, %v381
        %v383 = vrot.slane %v382, 4
        %v384 = vadd.f32 %v382, %v383
        %v385 = vrot.slane %v384, 2
        %v386 = vadd.f32 %v384, %v385
        %v387 = vrot.slane %v386, 1
        %v388 = vadd.f32 %v386, %v387
        %v389 = vadd.f32 %v379, %v388
        %390 = vst [vmem:[%s276] sm:$0x1] %v389
        %v391 = vpack.c.bf16 %v365, %v365
        %v392 = vpack.c.bf16 %v367, %v367
        %393 = vst [vmem:[%s268] sm:$0xf] %v391
        %394 = vst [vmem:[%s268 + $0x4] sm:$0xf] %v392
        %s395 = sadd.s32 %s24, %s25
        %s396 = smul.u32 2, %s395
        %p397 = scmp.lt.s32.totalorder %s396, 3
        %s398 = scalar_select %p397, %s396, 3
        %s399 = smul.addr %s398, 4
        %s400 = scalar_lea.vmem %s2, %s399
        %p401 = scmp.lt.s32.totalorder %s24, 1
        %s402 = scalar_select %p401, %s24, 1
        %s403 = scalar_lea.vmem %s3, %s402
        %p404 = scmp.lt.s32.totalorder %s24, 1
        %s405 = scalar_select %p404, %s24, 1
        %s406 = scalar_lea.vmem %s4, %s405
        // Predicated region
        $region41: #{_mpnn_forward_padded.3} parent=27 // pred_check
          %p407 = pneg %p101
        $region42: #{_mpnn_forward_padded.3} parent=27 // pred_check_branch
          %409 = sbr.rel (%p407) target = $region44
        $region43: #{_mpnn_forward_padded.3} parent=27 // pred_region
          %s410 = sadd.s32 %s24, %s25
          %s411 = smul.u32 2, %s410
        $region44: #{_mpnn_forward_padded.3} parent=27 // pred_fallthru
          _
        // Predicated region
        $region45: #{_mpnn_forward_padded.3} parent=27 // pred_check
          %p412 = pneg %p127
        $region46: #{_mpnn_forward_padded.3} parent=27 // pred_check_branch
          %414 = sbr.rel (%p412) target = $region48
        $region47: #{_mpnn_forward_padded.3} parent=27 // pred_region
          _
        $region48: #{_mpnn_forward_padded.3} parent=27 // pred_fallthru
          _
        // Predicated region
        $region49: #{_mpnn_forward_padded.3} parent=27 // pred_check
          %p415 = pneg %p153
        $region50: #{_mpnn_forward_padded.3} parent=27 // pred_check_branch
          %417 = sbr.rel (%p415) target = $region52
        $region51: #{_mpnn_forward_padded.3} parent=27 // pred_region
          _
        $region52: #{_mpnn_forward_padded.3} parent=27 // pred_fallthru
          _
      $region28: #{_mpnn_forward_padded.3} parent=5 // pred_fallthru
        _
      %p418 = scmp.le.s32.totalorder 2, %s15
      // Predicated region
      $region53: #{_mpnn_forward_padded.3} parent=5 // pred_check
        %p419 = pneg %p418
      $region54: #{_mpnn_forward_padded.3} parent=5 // pred_check_branch
        %421 = sbr.rel (%p419) target = $region56
      $region55: #{_mpnn_forward_padded.3} parent=5 // pred_region
        %s422 = ssub.s32 %s15, 2
        // Predicated region
        $region57: #{_mpnn_forward_padded.3} parent=55 // pred_check
          %p423 = pneg %p107
        $region58: #{_mpnn_forward_padded.3} parent=55 // pred_check_branch
          %425 = sbr.rel (%p423) target = $region60
        $region59: #{_mpnn_forward_padded.3} parent=55 // pred_region
          %s426 = sadd.s32 %s26, %s27
          %s427 = smul.u32 2, %s426
          %p428 = scmp.lt.s32.totalorder %s427, 3
          %s429 = scalar_select %p428, %s427, 3
          %s430 = smul.addr %s429, 4
          %s431 = scalar_lea.vmem %s2, %s430
        $region60: #{_mpnn_forward_padded.3} parent=55 // pred_fallthru
          _
        // Predicated region
        $region61: #{_mpnn_forward_padded.3} parent=55 // pred_check
          %p432 = pneg %p133
        $region62: #{_mpnn_forward_padded.3} parent=55 // pred_check_branch
          %434 = sbr.rel (%p432) target = $region64
        $region63: #{_mpnn_forward_padded.3} parent=55 // pred_region
          %p435 = scmp.lt.s32.totalorder %s26, 1
          %s436 = scalar_select %p435, %s26, 1
          %s437 = scalar_lea.vmem %s3, %s436
        $region64: #{_mpnn_forward_padded.3} parent=55 // pred_fallthru
          _
        // Predicated region
        $region65: #{_mpnn_forward_padded.3} parent=55 // pred_check
          %p438 = pneg %p159
        $region66: #{_mpnn_forward_padded.3} parent=55 // pred_check_branch
          %440 = sbr.rel (%p438) target = $region68
        $region67: #{_mpnn_forward_padded.3} parent=55 // pred_region
          %p441 = scmp.lt.s32.totalorder %s26, 1
          %s442 = scalar_select %p441, %s26, 1
          %s443 = scalar_lea.vmem %s4, %s442
        $region68: #{_mpnn_forward_padded.3} parent=55 // pred_fallthru
          _
      $region56: #{_mpnn_forward_padded.3} parent=5 // pred_fallthru
        _
    $region6: #{_mpnn_forward_padded.3} parent=1 // loop_footer
      %s19 = sadd.s32 1, %s15
    $region7: #{_mpnn_forward_padded.3} parent=1 // loop_footer_branch
      %14 = sbr.rel target = $region3
    $region8: #{_mpnn_forward_padded.3} parent=1 // loop_exit
      _
    %444 = vsyncpa [#allocation3], 1
    %s445 = scalar_lea.sflag [#allocation3], 1
    %446 = vsyncpa %s445, 1
    %447 = vsyncpa [#allocation5], 1

// kernel: _mpnn_forward_padded.4
$region0: #{_mpnn_forward_padded.4}
  #allocation0 [shape = 'u32[]', space=smem, size = 0x4, offset = 0x4, fixed_abs, tag = 'smem constant byte address 0x4 - core index']
  #allocation1 [shape = 'u32[72,128]{1,0:T(1,128)}', space=vmem, size = 0x9000, scoped, tag = 'internal scratch']
  %s0 = inlined_call_operand.vmem [shape: bf16[32,128], index: 0, kind: input, shape index: {}]
  %s1 = inlined_call_operand.vmem [shape: f32[32,1], index: 1, kind: input, shape index: {}]
  %s2 = inlined_call_operand.vmem [shape: f32[2,1,128], index: 2, kind: input, shape index: {}]
  %s3 = inlined_call_operand.vmem [shape: f32[2,1,128], index: 3, kind: input, shape index: {}]
  %s4 = inlined_call_operand.hbm [shape: bf16[128,128], index: 4, kind: input, shape index: {}]
  %s5 = inlined_call_operand.vmem [shape: bf16[32,128], index: 5, kind: output, shape index: {0}]
  %s6 = inlined_call_operand.vmem [shape: f32[2,1,128], index: 6, kind: output, shape index: {1}]
  %s7 = inlined_call_operand.vmem [shape: f32[2,1,128], index: 7, kind: output, shape index: {2}]
  %8 = xla_tuple %s5, %s6, %s7
  %s9 = sld [smem:[#allocation0]]
  $region77: #{_mpnn_forward_padded.4} parent=0
    _
  %s11 = ssub.s32 1, %s9
  %s12 = scalar_select 0, %s11, %s9
  $region1: #{_mpnn_forward_padded.4} parent=0
    #allocation2 [shape = 'u8[32768]{0}', space=vmem, size = 0x8000, scoped, tag = 'input window, operand 4, single buffered']
    #allocation3 [shape = 's32[2]{0}', space=sflag, size = 0x8, scoped, tag = 'scoped memory for _mpnn_forward_padded.4']
    %13 = vsyncpa [#allocation3], 0
    loop: start=0, step=1, limit=4
    $region2: #{_mpnn_forward_padded.4} parent=1 // loop_pre_header
      _
    $region3: #{_mpnn_forward_padded.4} parent=1 // loop_header
      %s15 = sphi 0, %s19
      %p16 = scmp.ge.s32.totalorder %s15, 4
      %s22 = sphi 0, %s34
      %s23 = sphi 0, %s30
      %s24 = sphi 0, %s22
      %s25 = sphi 0, %s23
      %s26 = sphi 0, %s24
      %s27 = sphi 0, %s25
      %s39 = sphi 0, %s41
      %s42 = sphi 0, %s39
      %s43 = sphi 0, %s42
      %s59 = sphi 0, %s43
      %s67 = sphi 0, %s69
      %s70 = sphi 0, %s67
      %s71 = sphi 0, %s70
      %s87 = sphi 0, %s71
      %s91 = sphi 0, %s91
      %s93 = sphi 0, %s91
      %s94 = sphi 0, %s93
      %s108 = sphi 0, %s94
      %s112 = sphi 0, %s112
      %s114 = sphi 0, %s112
      %s115 = sphi 0, %s114
      %s129 = sphi 0, %s115
      %s133 = sphi 0, %s133
      %s135 = sphi 0, %s133
      %s136 = sphi 0, %s135
      %s150 = sphi 0, %s136
      %s158 = sphi 0, %s160
      %s161 = sphi 0, %s158
      %s162 = sphi 0, %s161
      %s178 = sphi 0, %s162
      %s184 = sphi 0, %s186
      %s187 = sphi 0, %s184
      %s188 = sphi 0, %s187
      %s204 = sphi 0, %s188
      %s210 = sphi 0, %s212
      %s213 = sphi 0, %s210
      %s214 = sphi 0, %s213
      %s230 = sphi 0, %s214
    $region4: #{_mpnn_forward_padded.4} parent=1 // loop_header_branch
      %18 = sbr.rel (%p16) target = $region8
    $region5: #{_mpnn_forward_padded.4} parent=1 // loop_body
      %s20 = ssub.s32 %s15, 1
      %s21 = ssub.s32 %s15, 2
      %s28 = sadd.s32 1, %s23
      %p29 = scmp.ge.s32.totalorder %s28, 1
      %s30 = scalar_select %p29, 0, %s28
      %s31 = sadd.s32 1, %s22
      %s32 = scalar_select %p29, %s31, %s22
      %p33 = scmp.ge.s32.totalorder %s32, 2
      %s34 = scalar_select %p33, 0, %s32
      %s35 = sadd.s32 %s22, %s23
      %s36 = sadd.s32 %s34, %s30
      %s37 = ssub.s32 %s35, %s36
      %p38 = scmp.eq.s32.totalorder %s37, 0
      %s40 = sadd.s32 %s39, 1
      %s41 = scalar_select %p38, %s39, %s40
      %p44 = pneg %p38
      %p45 = scmp.eq.s32.totalorder %s15, 1
      %p46 = por %p44, %p45
      %p47 = scmp.ne.s32.totalorder %s39, %s42
      %p48 = scmp.eq.s32.totalorder %s15, 0
      %p49 = por %p47, %p48
      %p50 = scmp.ne.s32.totalorder %s39, %s42
      %p51 = scmp.eq.s32.totalorder %s20, 1
      %p52 = por %p50, %p51
      %p53 = scmp.ne.s32.totalorder %s42, %s43
      %p54 = scmp.eq.s32.totalorder %s20, 0
      %p55 = por %p53, %p54
      %p56 = scmp.ne.s32.totalorder %s42, %s43
      %p57 = scmp.eq.s32.totalorder %s21, 1
      %p58 = por %p56, %p57
      %p60 = scmp.ne.s32.totalorder %s43, %s59
      %p61 = scmp.eq.s32.totalorder %s21, 0
      %p62 = por %p60, %p61
      %s63 = sadd.s32 %s22, %s23
      %s64 = sadd.s32 %s34, %s30
      %s65 = ssub.s32 %s63, %s64
      %p66 = scmp.eq.s32.totalorder %s65, 0
      %s68 = sadd.s32 %s67, 1
      %s69 = scalar_select %p66, %s67, %s68
      %p72 = pneg %p66
      %p73 = scmp.eq.s32.totalorder %s15, 1
      %p74 = por %p72, %p73
      %p75 = scmp.ne.s32.totalorder %s67, %s70
      %p76 = scmp.eq.s32.totalorder %s15, 0
      %p77 = por %p75, %p76
      %p78 = scmp.ne.s32.totalorder %s67, %s70
      %p79 = scmp.eq.s32.totalorder %s20, 1
      %p80 = por %p78, %p79
      %p81 = scmp.ne.s32.totalorder %s70, %s71
      %p82 = scmp.eq.s32.totalorder %s20, 0
      %p83 = por %p81, %p82
      %p84 = scmp.ne.s32.totalorder %s70, %s71
      %p85 = scmp.eq.s32.totalorder %s21, 1
      %p86 = por %p84, %p85
      %p88 = scmp.ne.s32.totalorder %s71, %s87
      %p89 = scmp.eq.s32.totalorder %s21, 0
      %p90 = por %p88, %p89
      %s92 = sadd.s32 %s91, 1
      %p95 = scmp.eq.s32.totalorder %s15, 1
      %p96 = scmp.ne.s32.totalorder %s91, %s93
      %p97 = scmp.eq.s32.totalorder %s15, 0
      %p98 = por %p96, %p97
      %p99 = scmp.ne.s32.totalorder %s91, %s93
      %p100 = scmp.eq.s32.totalorder %s20, 1
      %p101 = por %p99, %p100
      %p102 = scmp.ne.s32.totalorder %s93, %s94
      %p103 = scmp.eq.s32.totalorder %s20, 0
      %p104 = por %p102, %p103
      %p105 = scmp.ne.s32.totalorder %s93, %s94
      %p106 = scmp.eq.s32.totalorder %s21, 1
      %p107 = por %p105, %p106
      %p109 = scmp.ne.s32.totalorder %s94, %s108
      %p110 = scmp.eq.s32.totalorder %s21, 0
      %p111 = por %p109, %p110
      %s113 = sadd.s32 %s112, 1
      %p116 = scmp.eq.s32.totalorder %s15, 1
      %p117 = scmp.ne.s32.totalorder %s112, %s114
      %p118 = scmp.eq.s32.totalorder %s15, 0
      %p119 = por %p117, %p118
      %p120 = scmp.ne.s32.totalorder %s112, %s114
      %p121 = scmp.eq.s32.totalorder %s20, 1
      %p122 = por %p120, %p121
      %p123 = scmp.ne.s32.totalorder %s114, %s115
      %p124 = scmp.eq.s32.totalorder %s20, 0
      %p125 = por %p123, %p124
      %p126 = scmp.ne.s32.totalorder %s114, %s115
      %p127 = scmp.eq.s32.totalorder %s21, 1
      %p128 = por %p126, %p127
      %p130 = scmp.ne.s32.totalorder %s115, %s129
      %p131 = scmp.eq.s32.totalorder %s21, 0
      %p132 = por %p130, %p131
      %s134 = sadd.s32 %s133, 1
      %p137 = scmp.eq.s32.totalorder %s15, 1
      %p138 = scmp.ne.s32.totalorder %s133, %s135
      %p139 = scmp.eq.s32.totalorder %s15, 0
      %p140 = por %p138, %p139
      %p141 = scmp.ne.s32.totalorder %s133, %s135
      %p142 = scmp.eq.s32.totalorder %s20, 1
      %p143 = por %p141, %p142
      %p144 = scmp.ne.s32.totalorder %s135, %s136
      %p145 = scmp.eq.s32.totalorder %s20, 0
      %p146 = por %p144, %p145
      %p147 = scmp.ne.s32.totalorder %s135, %s136
      %p148 = scmp.eq.s32.totalorder %s21, 1
      %p149 = por %p147, %p148
      %p151 = scmp.ne.s32.totalorder %s136, %s150
      %p152 = scmp.eq.s32.totalorder %s21, 0
      %p153 = por %p151, %p152
      %s154 = sadd.s32 %s22, %s23
      %s155 = sadd.s32 %s34, %s30
      %s156 = ssub.s32 %s154, %s155
      %p157 = scmp.eq.s32.totalorder %s156, 0
      %s159 = sadd.s32 %s158, 1
      %s160 = scalar_select %p157, %s158, %s159
      %p163 = pneg %p157
      %p164 = scmp.eq.s32.totalorder %s15, 1
      %p165 = por %p163, %p164
      %p166 = scmp.ne.s32.totalorder %s158, %s161
      %p167 = scmp.eq.s32.totalorder %s15, 0
      %p168 = por %p166, %p167
      %p169 = scmp.ne.s32.totalorder %s158, %s161
      %p170 = scmp.eq.s32.totalorder %s20, 1
      %p171 = por %p169, %p170
      %p172 = scmp.ne.s32.totalorder %s161, %s162
      %p173 = scmp.eq.s32.totalorder %s20, 0
      %p174 = por %p172, %p173
      %p175 = scmp.ne.s32.totalorder %s161, %s162
      %p176 = scmp.eq.s32.totalorder %s21, 1
      %p177 = por %p175, %p176
      %p179 = scmp.ne.s32.totalorder %s162, %s178
      %p180 = scmp.eq.s32.totalorder %s21, 0
      %p181 = por %p179, %p180
      %s182 = ssub.s32 %s22, %s34
      %p183 = scmp.eq.s32.totalorder %s182, 0
      %s185 = sadd.s32 %s184, 1
      %s186 = scalar_select %p183, %s184, %s185
      %p189 = pneg %p183
      %p190 = scmp.eq.s32.totalorder %s15, 1
      %p191 = por %p189, %p190
      %p192 = scmp.ne.s32.totalorder %s184, %s187
      %p193 = scmp.eq.s32.totalorder %s15, 0
      %p194 = por %p192, %p193
      %p195 = scmp.ne.s32.totalorder %s184, %s187
      %p196 = scmp.eq.s32.totalorder %s20, 1
      %p197 = por %p195, %p196
      %p198 = scmp.ne.s32.totalorder %s187, %s188
      %p199 = scmp.eq.s32.totalorder %s20, 0
      %p200 = por %p198, %p199
      %p201 = scmp.ne.s32.totalorder %s187, %s188
      %p202 = scmp.eq.s32.totalorder %s21, 1
      %p203 = por %p201, %p202
      %p205 = scmp.ne.s32.totalorder %s188, %s204
      %p206 = scmp.eq.s32.totalorder %s21, 0
      %p207 = por %p205, %p206
      %s208 = ssub.s32 %s22, %s34
      %p209 = scmp.eq.s32.totalorder %s208, 0
      %s211 = sadd.s32 %s210, 1
      %s212 = scalar_select %p209, %s210, %s211
      %p215 = pneg %p209
      %p216 = scmp.eq.s32.totalorder %s15, 1
      %p217 = por %p215, %p216
      %p218 = scmp.ne.s32.totalorder %s210, %s213
      %p219 = scmp.eq.s32.totalorder %s15, 0
      %p220 = por %p218, %p219
      %p221 = scmp.ne.s32.totalorder %s210, %s213
      %p222 = scmp.eq.s32.totalorder %s20, 1
      %p223 = por %p221, %p222
      %p224 = scmp.ne.s32.totalorder %s213, %s214
      %p225 = scmp.eq.s32.totalorder %s20, 0
      %p226 = por %p224, %p225
      %p227 = scmp.ne.s32.totalorder %s213, %s214
      %p228 = scmp.eq.s32.totalorder %s21, 1
      %p229 = por %p227, %p228
      %p231 = scmp.ne.s32.totalorder %s214, %s230
      %p232 = scmp.eq.s32.totalorder %s21, 0
      %p233 = por %p231, %p232
      %p234 = scmp.le.s32.totalorder 1, %s15
      %p235 = scmp.lt.s32.totalorder %s15, 3
      %p236 = pnand %p234, %p235
      %p237 = pneg %p236
      // Predicated region
      $region9: #{_mpnn_forward_padded.4} parent=5 // pred_check
        _
      $region10: #{_mpnn_forward_padded.4} parent=5 // pred_check_branch
        %239 = sbr.rel (%p236) target = $region12
      $region11: #{_mpnn_forward_padded.4} parent=5 // pred_region
        %s240 = ssub.s32 %s15, 1
        // Predicated region
        $region13: #{_mpnn_forward_padded.4} parent=11 // pred_check
          %p241 = pneg %p104
        $region14: #{_mpnn_forward_padded.4} parent=11 // pred_check_branch
          %243 = sbr.rel (%p241) target = $region16
        $region15: #{_mpnn_forward_padded.4} parent=11 // pred_region
          _
        $region16: #{_mpnn_forward_padded.4} parent=11 // pred_fallthru
          _
        // Predicated region
        $region17: #{_mpnn_forward_padded.4} parent=11 // pred_check
          %p244 = pneg %p125
        $region18: #{_mpnn_forward_padded.4} parent=11 // pred_check_branch
          %246 = sbr.rel (%p244) target = $region20
        $region19: #{_mpnn_forward_padded.4} parent=11 // pred_region
          _
        $region20: #{_mpnn_forward_padded.4} parent=11 // pred_fallthru
          _
        // Predicated region
        $region21: #{_mpnn_forward_padded.4} parent=11 // pred_check
          %p247 = pneg %p146
        $region22: #{_mpnn_forward_padded.4} parent=11 // pred_check_branch
          %249 = sbr.rel (%p247) target = $region24
        $region23: #{_mpnn_forward_padded.4} parent=11 // pred_region
          %251 = vsyncadd [#allocation3], 0
          %s252 = sshll.u32 %s4, 4
          %s253 = int_to_ptr.hbm [resolvable:$true] %s252
          %s254 = sshll.u32 [#allocation2], 4
          %s255 = int_to_ptr.vmem [resolvable:$true] %s254
          %260 = dma.hbm_to_vmem [thread:$0]  %s253, 1024, %s255, [#allocation3], 64, 64, 4
        $region24: #{_mpnn_forward_padded.4} parent=11 // pred_fallthru
          _
      $region12: #{_mpnn_forward_padded.4} parent=5 // pred_fallthru
        _
      %p261 = scmp.lt.s32.totalorder %s15, 2
      // Predicated region
      $region25: #{_mpnn_forward_padded.4} parent=5 // pred_check
        %p262 = pneg %p261
      $region26: #{_mpnn_forward_padded.4} parent=5 // pred_check_branch
        %264 = sbr.rel (%p262) target = $region28
      $region27: #{_mpnn_forward_padded.4} parent=5 // pred_region
        // Predicated region
        $region29: #{_mpnn_forward_padded.4} parent=27 // pred_check
          %p265 = pneg %p49
        $region30: #{_mpnn_forward_padded.4} parent=27 // pred_check_branch
          %267 = sbr.rel (%p265) target = $region32
        $region31: #{_mpnn_forward_padded.4} parent=27 // pred_region
          %s268 = sadd.s32 %s22, %s23
          %s269 = smul.u32 2, %s268
          %p270 = scmp.lt.s32.totalorder %s269, 3
          %s271 = scalar_select %p270, %s269, 3
          %s272 = smul.addr %s271, 4
          %s273 = scalar_lea.vmem %s0, %s272
          %s274 = sadd.s32 %s22, %s23
          %s275 = smul.u32 2, %s274
        $region32: #{_mpnn_forward_padded.4} parent=27 // pred_fallthru
          _
        // Predicated region
        $region33: #{_mpnn_forward_padded.4} parent=27 // pred_check
          %p276 = pneg %p77
        $region34: #{_mpnn_forward_padded.4} parent=27 // pred_check_branch
          %278 = sbr.rel (%p276) target = $region36
        $region35: #{_mpnn_forward_padded.4} parent=27 // pred_region
          %s279 = sadd.s32 %s22, %s23
          %s280 = smul.u32 2, %s279
          %p281 = scmp.lt.s32.totalorder %s280, 3
          %s282 = scalar_select %p281, %s280, 3
          %s283 = smul.addr %s282, 8
          %s284 = scalar_lea.vmem %s1, %s283
          %s285 = sadd.s32 %s22, %s23
          %s286 = smul.u32 2, %s285
        $region36: #{_mpnn_forward_padded.4} parent=27 // pred_fallthru
          _
      $region28: #{_mpnn_forward_padded.4} parent=5 // pred_fallthru
        _
      %p287 = scmp.le.s32.totalorder 1, %s15
      %p288 = scmp.lt.s32.totalorder %s15, 3
      %p289 = pnand %p287, %p288
      %p290 = pneg %p289
      // Predicated region
      $region37: #{_mpnn_forward_padded.4} parent=5 // pred_check
        _
      $region38: #{_mpnn_forward_padded.4} parent=5 // pred_check_branch
        %292 = sbr.rel (%p289) target = $region40
      $region39: #{_mpnn_forward_padded.4} parent=5 // pred_region
        %s293 = ssub.s32 %s15, 1
        // Predicated region
        $region41: #{_mpnn_forward_padded.4} parent=39 // pred_check
          %p294 = pneg %p146
        $region42: #{_mpnn_forward_padded.4} parent=39 // pred_check_branch
          %296 = sbr.rel (%p294) target = $region44
        $region43: #{_mpnn_forward_padded.4} parent=39 // pred_region
          %298 = dma.done [#allocation3], 1024
        $region44: #{_mpnn_forward_padded.4} parent=39 // pred_fallthru
          _
        %s299 = sadd.s32 %s24, %s25
        %s300 = smul.u32 2, %s299
        %p301 = scmp.lt.s32.totalorder %s300, 3
        %s302 = scalar_select %p301, %s300, 3
        %s303 = smul.addr %s302, 4
        %s304 = scalar_lea.vmem %s0, %s303
        %p305 = pneg %p55
        %p306 = pneg %p52
        %s307 = sadd.s32 %s24, %s25
        %s308 = smul.u32 2, %s307
        %p309 = scmp.lt.s32.totalorder %s308, 3
        %s310 = scalar_select %p309, %s308, 3
        %s311 = smul.addr %s310, 8
        %s312 = scalar_lea.vmem %s1, %s311
        %p313 = pneg %p83
        %p314 = pneg %p80
        %p315 = pneg %p104
        %p316 = pneg %p101
        %p317 = pneg %p125
        %p318 = pneg %p122
        %p319 = pneg %p146
        %p320 = pneg %p143
        %p321 = pneg %p174
        %p322 = pneg %p171
        %s323 = sadd.s32 %s24, %s25
        %s324 = smul.u32 2, %s323
        %p325 = scmp.lt.s32.totalorder %s324, 3
        %s326 = scalar_select %p325, %s324, 3
        %s327 = smul.addr %s326, 4
        %s328 = scalar_lea.vmem %s5, %s327
        %p329 = pneg %p200
        %p330 = pneg %p197
        %p331 = scmp.lt.s32.totalorder %s24, 1
        %s332 = scalar_select %p331, %s24, 1
        %s333 = scalar_lea.vmem %s6, %s332
        %p334 = pneg %p226
        %p335 = pneg %p223
        %p336 = scmp.lt.s32.totalorder %s24, 1
        %s337 = scalar_select %p336, %s24, 1
        %s338 = scalar_lea.vmem %s7, %s337
        %s339 = sadd.s32 %s24, %s25
        %s340 = smul.u32 2, %s339
        %p341 = scmp.lt.s32.totalorder %s340, 3
        %s342 = scalar_select %p341, %s340, 3
        %s343 = smul.addr %s342, 4
        %s344 = scalar_lea.vmem %s0, %s343
        %s345 = sadd.s32 %s24, %s25
        %s346 = smul.u32 2, %s345
        %s347 = sadd.s32 %s24, %s25
        %s348 = smul.u32 2, %s347
        %p349 = scmp.lt.s32.totalorder %s348, 3
        %s350 = scalar_select %p349, %s348, 3
        %s351 = smul.addr %s350, 8
        %s352 = scalar_lea.vmem %s1, %s351
        %s353 = sadd.s32 %s24, %s25
        %s354 = smul.u32 2, %s353
        %s355 = sadd.s32 %s24, %s25
        %s356 = smul.u32 2, %s355
        %p357 = scmp.lt.s32.totalorder %s356, 3
        %s358 = scalar_select %p357, %s356, 3
        %s359 = smul.addr %s358, 4
        %s360 = scalar_lea.vmem %s5, %s359
        %s361 = sadd.s32 %s24, %s25
        %s362 = smul.u32 2, %s361
        %p363 = scmp.lt.s32.totalorder %s24, 1
        %s364 = scalar_select %p363, %s24, 1
        %s365 = scalar_lea.vmem %s6, %s364
        %p366 = scmp.lt.s32.totalorder %s24, 1
        %s367 = scalar_select %p366, %s24, 1
        %s368 = scalar_lea.vmem %s7, %s367
        %p369 = scmp.eq.s32.totalorder %s25, 0
        // Predicated region
        $region45: #{_mpnn_forward_padded.4} parent=39 // pred_check
          %p370 = pneg %p369
        $region46: #{_mpnn_forward_padded.4} parent=39 // pred_check_branch
          %372 = sbr.rel (%p370) target = $region48
        $region47: #{_mpnn_forward_padded.4} parent=39 // pred_region
          %373 = vst [vmem:[%s365] sm:$0x1] 0.0
          %374 = vst [vmem:[%s368] sm:$0x1] 0.0
        $region48: #{_mpnn_forward_padded.4} parent=39 // pred_fallthru
          _
        %v375 = vld [vmem:[%s2] sm:$0x1]
        %v376 = vld [vmem:[%s2 + $0x1] sm:$0x1]
        %vm377 = vcmask 1040384
        %v378 = vsel %vm377, %v375, 0.0
        %v379 = vsel %vm377, %v376, 0.0
        %v380 = vadd.f32 %v378, %v379
        %v381 = vmul.f32 %v380, 0.0625
        %v382 = vld [vmem:[%s3] sm:$0x1]
        %v383 = vld [vmem:[%s3 + $0x1] sm:$0x1]
        %v384 = vsel %vm377, %v382, 0.0
        %v385 = vsel %vm377, %v383, 0.0
        %v386 = vadd.f32 %v384, %v385
        %v387 = vmul.f32 %v386, 0.0625
        %v388 = vmul.f32 %v381, %v381
        %v389 = vsub.f32 %v387, %v388
        %v390 = vmax.f32 %v389, 0.0
        %v391 = vadd.f32 %v390, 1e-05
        %v392 = vrsqrt.pop %v391
        %v393 = vmul.f32 %v392, %v391
        %v394 = vmul.f32 %v393, %v392
        %v395 = vmul.f32 0.5, %v394
        %v396 = vsub.f32 1.5, %v395
        %v397 = vmul.f32 %v392, %v396
        %vm398 = vweird.f32 %v391
        %vm399 = vweird.f32 %v392
        %vm400 = vmor %vm398, %vm399
        %v401 = vsel %vm400, %v392, %v397
        %v402 = vld [vmem:[%s344] sm:$0xf]
        %v403 = vld [vmem:[%s344 + $0x4] sm:$0xf]
        %v404 = vunpack.c.l.bf16 %v402
        %v405 = vunpack.c.l.bf16 %v403
        %v406 = vperm.slane %v381, 0
        %v407 = vsub.f32 %v404, %v406
        %v408 = vsub.f32 %v405, %v406
        %v409 = vperm.slane %v401, 0
        %v410 = vmul.f32 %v407, %v409
        %v411 = vmul.f32 %v408, %v409
        %v412 = vmax.f32 %v410, 0.0
        %v413 = vmax.f32 %v411, 0.0
        %v414 = vld [vmem:[%s352] sm:$0xff]
        %v415 = vld [vmem:[%s352 + $0x8] sm:$0xff]
        %417 = vset.pattern.permute.xlu0 0
        %418 = vperm.xlu0 %417, %v414
        %v419 = vpop.permute.xlu0 %418
        %422 = vset.pattern.permute.xlu0 0
        %423 = vperm.xlu0 %422, %v415
        %v424 = vpop.permute.xlu0 %423
        %v426 = vmul.f32 %v412, %v419
        %v427 = vmul.f32 %v413, %v424
        %v428 = vpack.c.bf16 %v427, %v426
        %v429 = vld [vmem:[#allocation2] sm:$0xf]
        %v430 = vld [vmem:[#allocation2 + $0x4] sm:$0xf]
        %v431 = vld [vmem:[#allocation2 + $0x8] sm:$0xf]
        %v432 = vld [vmem:[#allocation2 + $0xc] sm:$0xf]
        %v433 = vld [vmem:[#allocation2 + $0x10] sm:$0xf]
        %v434 = vld [vmem:[#allocation2 + $0x14] sm:$0xf]
        %v435 = vld [vmem:[#allocation2 + $0x18] sm:$0xf]
        %v436 = vld [vmem:[#allocation2 + $0x1c] sm:$0xf]
        %v437 = vld [vmem:[#allocation2 + $0x20] sm:$0xf]
        %v438 = vld [vmem:[#allocation2 + $0x24] sm:$0xf]
        %v439 = vld [vmem:[#allocation2 + $0x28] sm:$0xf]
        %v440 = vld [vmem:[#allocation2 + $0x2c] sm:$0xf]
        %v441 = vld [vmem:[#allocation2 + $0x30] sm:$0xf]
        %v442 = vld [vmem:[#allocation2 + $0x34] sm:$0xf]
        %v443 = vld [vmem:[#allocation2 + $0x38] sm:$0xf]
        %v444 = vld [vmem:[#allocation2 + $0x3c] sm:$0xf]
        %v461 = vunpack.c.l.b16 %v429
        %v462 = vunpack.c.l.b16 %v430
        %v463 = vunpack.c.l.b16 %v431
        %v464 = vunpack.c.l.b16 %v432
        %v465 = vunpack.c.l.b16 %v433
        %v466 = vunpack.c.l.b16 %v434
        %v467 = vunpack.c.l.b16 %v435
        %v468 = vunpack.c.l.b16 %v436
        %v469 = vunpack.c.l.b16 %v437
        %v470 = vunpack.c.l.b16 %v438
        %v471 = vunpack.c.l.b16 %v439
        %v472 = vunpack.c.l.b16 %v440
        %v473 = vunpack.c.l.b16 %v441
        %v474 = vunpack.c.l.b16 %v442
        %v475 = vunpack.c.l.b16 %v443
        %v476 = vunpack.c.l.b16 %v444
        %v477 = vpack.c.b16 %v462, %v461
        %v478 = vpack.c.b16 %v464, %v463
        %v479 = vpack.c.b16 %v466, %v465
        %v480 = vpack.c.b16 %v468, %v467
        %v481 = vpack.c.b16 %v470, %v469
        %v482 = vpack.c.b16 %v472, %v471
        %v483 = vpack.c.b16 %v474, %v473
        %v484 = vpack.c.b16 %v476, %v475
        %493 = vmatpush.bf16.msra.mxu0 %v484
        %494 = vmatpush.bf16.msra.mxu0 %v483
        %495 = vmatpush.bf16.msra.mxu0 %v482
        %496 = vmatpush.bf16.msra.mxu0 %v481
        %497 = vmatpush.bf16.msra.mxu0 %v480
        %498 = vmatpush.bf16.msra.mxu0 %v479
        %499 = vmatpush.bf16.msra.mxu0 %v478
        %500 = vmatpush.bf16.msra.mxu0 %v477
        %501 = vmatmul.bf16.gmra.mxu0 %v428
        %v502 = vpop.f32.mrf.mxu0
        %v503 = vadd.f32 0.0, %v502
        %v504 = vpop.f32.mrf.mxu0
        %v505 = vadd.f32 0.0, %v504
        %506 = vdwg.mxu0
        %v507 = vld [vmem:[%s365] sm:$0x1]
        %v508 = vadd.f32 %v503, %v505
        %v509 = vrot.slane %v508, 4
        %v510 = vadd.f32 %v508, %v509
        %v511 = vrot.slane %v510, 2
        %v512 = vadd.f32 %v510, %v511
        %v513 = vrot.slane %v512, 1
        %v514 = vadd.f32 %v512, %v513
        %v515 = vadd.f32 %v507, %v514
        %516 = vst [vmem:[%s365] sm:$0x1] %v515
        %v517 = vld [vmem:[%s368] sm:$0x1]
        %v518 = vmul.f32 %v503, %v503
        %v519 = vmul.f32 %v505, %v505
        %v520 = vadd.f32 %v518, %v519
        %v521 = vrot.slane %v520, 4
        %v522 = vadd.f32 %v520, %v521
        %v523 = vrot.slane %v522, 2
        %v524 = vadd.f32 %v522, %v523
        %v525 = vrot.slane %v524, 1
        %v526 = vadd.f32 %v524, %v525
        %v527 = vadd.f32 %v517, %v526
        %528 = vst [vmem:[%s368] sm:$0x1] %v527
        %v529 = vpack.c.bf16 %v503, %v503
        %v530 = vpack.c.bf16 %v505, %v505
        %531 = vst [vmem:[%s360] sm:$0xf] %v529
        %532 = vst [vmem:[%s360 + $0x4] sm:$0xf] %v530
        %s533 = sadd.s32 %s24, %s25
        %s534 = smul.u32 2, %s533
        %p535 = scmp.lt.s32.totalorder %s534, 3
        %s536 = scalar_select %p535, %s534, 3
        %s537 = smul.addr %s536, 4
        %s538 = scalar_lea.vmem %s5, %s537
        %p539 = scmp.lt.s32.totalorder %s24, 1
        %s540 = scalar_select %p539, %s24, 1
        %s541 = scalar_lea.vmem %s6, %s540
        %p542 = scmp.lt.s32.totalorder %s24, 1
        %s543 = scalar_select %p542, %s24, 1
        %s544 = scalar_lea.vmem %s7, %s543
        // Predicated region
        $region49: #{_mpnn_forward_padded.4} parent=39 // pred_check
          %p545 = pneg %p171
        $region50: #{_mpnn_forward_padded.4} parent=39 // pred_check_branch
          %547 = sbr.rel (%p545) target = $region52
        $region51: #{_mpnn_forward_padded.4} parent=39 // pred_region
          %s548 = sadd.s32 %s24, %s25
          %s549 = smul.u32 2, %s548
        $region52: #{_mpnn_forward_padded.4} parent=39 // pred_fallthru
          _
        // Predicated region
        $region53: #{_mpnn_forward_padded.4} parent=39 // pred_check
          %p550 = pneg %p197
        $region54: #{_mpnn_forward_padded.4} parent=39 // pred_check_branch
          %552 = sbr.rel (%p550) target = $region56
        $region55: #{_mpnn_forward_padded.4} parent=39 // pred_region
          _
        $region56: #{_mpnn_forward_padded.4} parent=39 // pred_fallthru
          _
        // Predicated region
        $region57: #{_mpnn_forward_padded.4} parent=39 // pred_check
          %p553 = pneg %p223
        $region58: #{_mpnn_forward_padded.4} parent=39 // pred_check_branch
          %555 = sbr.rel (%p553) target = $region60
        $region59: #{_mpnn_forward_padded.4} parent=39 // pred_region
          _
        $region60: #{_mpnn_forward_padded.4} parent=39 // pred_fallthru
          _
      $region40: #{_mpnn_forward_padded.4} parent=5 // pred_fallthru
        _
      %p556 = scmp.le.s32.totalorder 2, %s15
      // Predicated region
      $region61: #{_mpnn_forward_padded.4} parent=5 // pred_check
        %p557 = pneg %p556
      $region62: #{_mpnn_forward_padded.4} parent=5 // pred_check_branch
        %559 = sbr.rel (%p557) target = $region64
      $region63: #{_mpnn_forward_padded.4} parent=5 // pred_region
        %s560 = ssub.s32 %s15, 2
        // Predicated region
        $region65: #{_mpnn_forward_padded.4} parent=63 // pred_check
          %p561 = pneg %p177
        $region66: #{_mpnn_forward_padded.4} parent=63 // pred_check_branch
          %563 = sbr.rel (%p561) target = $region68
        $region67: #{_mpnn_forward_padded.4} parent=63 // pred_region
          %s564 = sadd.s32 %s26, %s27
          %s565 = smul.u32 2, %s564
          %p566 = scmp.lt.s32.totalorder %s565, 3
          %s567 = scalar_select %p566, %s565, 3
          %s568 = smul.addr %s567, 4
          %s569 = scalar_lea.vmem %s5, %s568
        $region68: #{_mpnn_forward_padded.4} parent=63 // pred_fallthru
          _
        // Predicated region
        $region69: #{_mpnn_forward_padded.4} parent=63 // pred_check
          %p570 = pneg %p203
        $region70: #{_mpnn_forward_padded.4} parent=63 // pred_check_branch
          %572 = sbr.rel (%p570) target = $region72
        $region71: #{_mpnn_forward_padded.4} parent=63 // pred_region
          %p573 = scmp.lt.s32.totalorder %s26, 1
          %s574 = scalar_select %p573, %s26, 1
          %s575 = scalar_lea.vmem %s6, %s574
        $region72: #{_mpnn_forward_padded.4} parent=63 // pred_fallthru
          _
        // Predicated region
        $region73: #{_mpnn_forward_padded.4} parent=63 // pred_check
          %p576 = pneg %p229
        $region74: #{_mpnn_forward_padded.4} parent=63 // pred_check_branch
          %578 = sbr.rel (%p576) target = $region76
        $region75: #{_mpnn_forward_padded.4} parent=63 // pred_region
          %p579 = scmp.lt.s32.totalorder %s26, 1
          %s580 = scalar_select %p579, %s26, 1
          %s581 = scalar_lea.vmem %s7, %s580
        $region76: #{_mpnn_forward_padded.4} parent=63 // pred_fallthru
          _
      $region64: #{_mpnn_forward_padded.4} parent=5 // pred_fallthru
        _
    $region6: #{_mpnn_forward_padded.4} parent=1 // loop_footer
      %s19 = sadd.s32 1, %s15
    $region7: #{_mpnn_forward_padded.4} parent=1 // loop_footer_branch
      %14 = sbr.rel target = $region3
    $region8: #{_mpnn_forward_padded.4} parent=1 // loop_exit
      _
    %582 = vsyncpa [#allocation3], 1
    %s583 = scalar_lea.sflag [#allocation3], 1
    %584 = vsyncpa %s583, 1

// kernel: _mpnn_forward_padded.5
$region0: #{_mpnn_forward_padded.5}
  #allocation0 [shape = 'u32[]', space=smem, size = 0x4, offset = 0x4, fixed_abs, tag = 'smem constant byte address 0x4 - core index']
  #allocation1 [shape = 'u32[72,128]{1,0:T(1,128)}', space=vmem, size = 0x9000, scoped, tag = 'internal scratch']
  %s0 = inlined_call_operand.vmem [shape: bf16[32,128], index: 0, kind: input, shape index: {}]
  %s1 = inlined_call_operand.vmem [shape: f32[32,1], index: 1, kind: input, shape index: {}]
  %s2 = inlined_call_operand.vmem [shape: f32[2,1,128], index: 2, kind: input, shape index: {}]
  %s3 = inlined_call_operand.vmem [shape: f32[2,1,128], index: 3, kind: input, shape index: {}]
  %s4 = inlined_call_operand.hbm [shape: bf16[128,128], index: 4, kind: input, shape index: {}]
  %s5 = inlined_call_operand.vmem [shape: f32[1,128], index: 5, kind: input, shape index: {}]
  %s6 = inlined_call_operand.hbm [shape: f32[32,128], index: 6, kind: output, shape index: {}]
  %s7 = sld [smem:[#allocation0]]
  $region61: #{_mpnn_forward_padded.5} parent=0
    _
  %s9 = ssub.s32 1, %s7
  %s10 = scalar_select 0, %s9, %s7
  $region1: #{_mpnn_forward_padded.5} parent=0
    #allocation2 [shape = 'u8[32768]{0}', space=vmem, size = 0x8000, scoped, tag = 'input window, operand 4, single buffered']
    #allocation3 [shape = 's32[2]{0}', space=sflag, size = 0x8, scoped, tag = 'scoped memory for _mpnn_forward_padded.5']
    #allocation4 [shape = 's32[2]{0}', space=sflag, size = 0x8, scoped, tag = 'scoped memory for _mpnn_forward_padded.5']
    #allocation5 [shape = 'u8[16384]{0}', space=vmem, size = 0x4000, scoped, tag = 'output window, operand 0']
    %11 = vsyncpa [#allocation3], 0
    %12 = vsyncpa [#allocation4], 0
    %s13 = scalar_lea.sflag [#allocation4], 1
    %14 = vsyncpa %s13, 0
    loop: start=0, step=1, limit=4
    $region2: #{_mpnn_forward_padded.5} parent=1 // loop_pre_header
      _
    $region3: #{_mpnn_forward_padded.5} parent=1 // loop_header
      %s16 = sphi 0, %s20
      %p17 = scmp.ge.s32.totalorder %s16, 4
      %s26 = sphi 0, %s28
      %s29 = sphi 0, %s26
      %s30 = sphi 0, %s29
      %s46 = sphi 0, %s30
      %s52 = sphi 0, %s54
      %s55 = sphi 0, %s52
      %s56 = sphi 0, %s55
      %s72 = sphi 0, %s56
      %s76 = sphi 0, %s76
      %s78 = sphi 0, %s76
      %s79 = sphi 0, %s78
      %s93 = sphi 0, %s79
      %s97 = sphi 0, %s97
      %s99 = sphi 0, %s97
      %s100 = sphi 0, %s99
      %s114 = sphi 0, %s100
      %s118 = sphi 0, %s118
      %s120 = sphi 0, %s118
      %s121 = sphi 0, %s120
      %s135 = sphi 0, %s121
      %s139 = sphi 0, %s139
      %s141 = sphi 0, %s139
      %s142 = sphi 0, %s141
      %s156 = sphi 0, %s142
      %s162 = sphi 0, %s164
      %s165 = sphi 0, %s162
      %s166 = sphi 0, %s165
      %s182 = sphi 0, %s166
    $region4: #{_mpnn_forward_padded.5} parent=1 // loop_header_branch
      %19 = sbr.rel (%p17) target = $region8
    $region5: #{_mpnn_forward_padded.5} parent=1 // loop_body
      %s21 = ssub.s32 %s16, 1
      %s22 = ssub.s32 %s16, 2
      %s23 = sadd.s32 %s16, 1
      %s24 = ssub.s32 %s16, %s23
      %p25 = scmp.eq.s32.totalorder %s24, 0
      %s27 = sadd.s32 %s26, 1
      %s28 = scalar_select %p25, %s26, %s27
      %p31 = pneg %p25
      %p32 = scmp.eq.s32.totalorder %s16, 1
      %p33 = por %p31, %p32
      %p34 = scmp.ne.s32.totalorder %s26, %s29
      %p35 = scmp.eq.s32.totalorder %s16, 0
      %p36 = por %p34, %p35
      %p37 = scmp.ne.s32.totalorder %s26, %s29
      %p38 = scmp.eq.s32.totalorder %s21, 1
      %p39 = por %p37, %p38
      %p40 = scmp.ne.s32.totalorder %s29, %s30
      %p41 = scmp.eq.s32.totalorder %s21, 0
      %p42 = por %p40, %p41
      %p43 = scmp.ne.s32.totalorder %s29, %s30
      %p44 = scmp.eq.s32.totalorder %s22, 1
      %p45 = por %p43, %p44
      %p47 = scmp.ne.s32.totalorder %s30, %s46
      %p48 = scmp.eq.s32.totalorder %s22, 0
      %p49 = por %p47, %p48
      %s50 = ssub.s32 %s16, %s23
      %p51 = scmp.eq.s32.totalorder %s50, 0
      %s53 = sadd.s32 %s52, 1
      %s54 = scalar_select %p51, %s52, %s53
      %p57 = pneg %p51
      %p58 = scmp.eq.s32.totalorder %s16, 1
      %p59 = por %p57, %p58
      %p60 = scmp.ne.s32.totalorder %s52, %s55
      %p61 = scmp.eq.s32.totalorder %s16, 0
      %p62 = por %p60, %p61
      %p63 = scmp.ne.s32.totalorder %s52, %s55
      %p64 = scmp.eq.s32.totalorder %s21, 1
      %p65 = por %p63, %p64
      %p66 = scmp.ne.s32.totalorder %s55, %s56
      %p67 = scmp.eq.s32.totalorder %s21, 0
      %p68 = por %p66, %p67
      %p69 = scmp.ne.s32.totalorder %s55, %s56
      %p70 = scmp.eq.s32.totalorder %s22, 1
      %p71 = por %p69, %p70
      %p73 = scmp.ne.s32.totalorder %s56, %s72
      %p74 = scmp.eq.s32.totalorder %s22, 0
      %p75 = por %p73, %p74
      %s77 = sadd.s32 %s76, 1
      %p80 = scmp.eq.s32.totalorder %s16, 1
      %p81 = scmp.ne.s32.totalorder %s76, %s78
      %p82 = scmp.eq.s32.totalorder %s16, 0
      %p83 = por %p81, %p82
      %p84 = scmp.ne.s32.totalorder %s76, %s78
      %p85 = scmp.eq.s32.totalorder %s21, 1
      %p86 = por %p84, %p85
      %p87 = scmp.ne.s32.totalorder %s78, %s79
      %p88 = scmp.eq.s32.totalorder %s21, 0
      %p89 = por %p87, %p88
      %p90 = scmp.ne.s32.totalorder %s78, %s79
      %p91 = scmp.eq.s32.totalorder %s22, 1
      %p92 = por %p90, %p91
      %p94 = scmp.ne.s32.totalorder %s79, %s93
      %p95 = scmp.eq.s32.totalorder %s22, 0
      %p96 = por %p94, %p95
      %s98 = sadd.s32 %s97, 1
      %p101 = scmp.eq.s32.totalorder %s16, 1
      %p102 = scmp.ne.s32.totalorder %s97, %s99
      %p103 = scmp.eq.s32.totalorder %s16, 0
      %p104 = por %p102, %p103
      %p105 = scmp.ne.s32.totalorder %s97, %s99
      %p106 = scmp.eq.s32.totalorder %s21, 1
      %p107 = por %p105, %p106
      %p108 = scmp.ne.s32.totalorder %s99, %s100
      %p109 = scmp.eq.s32.totalorder %s21, 0
      %p110 = por %p108, %p109
      %p111 = scmp.ne.s32.totalorder %s99, %s100
      %p112 = scmp.eq.s32.totalorder %s22, 1
      %p113 = por %p111, %p112
      %p115 = scmp.ne.s32.totalorder %s100, %s114
      %p116 = scmp.eq.s32.totalorder %s22, 0
      %p117 = por %p115, %p116
      %s119 = sadd.s32 %s118, 1
      %p122 = scmp.eq.s32.totalorder %s16, 1
      %p123 = scmp.ne.s32.totalorder %s118, %s120
      %p124 = scmp.eq.s32.totalorder %s16, 0
      %p125 = por %p123, %p124
      %p126 = scmp.ne.s32.totalorder %s118, %s120
      %p127 = scmp.eq.s32.totalorder %s21, 1
      %p128 = por %p126, %p127
      %p129 = scmp.ne.s32.totalorder %s120, %s121
      %p130 = scmp.eq.s32.totalorder %s21, 0
      %p131 = por %p129, %p130
      %p132 = scmp.ne.s32.totalorder %s120, %s121
      %p133 = scmp.eq.s32.totalorder %s22, 1
      %p134 = por %p132, %p133
      %p136 = scmp.ne.s32.totalorder %s121, %s135
      %p137 = scmp.eq.s32.totalorder %s22, 0
      %p138 = por %p136, %p137
      %s140 = sadd.s32 %s139, 1
      %p143 = scmp.eq.s32.totalorder %s16, 1
      %p144 = scmp.ne.s32.totalorder %s139, %s141
      %p145 = scmp.eq.s32.totalorder %s16, 0
      %p146 = por %p144, %p145
      %p147 = scmp.ne.s32.totalorder %s139, %s141
      %p148 = scmp.eq.s32.totalorder %s21, 1
      %p149 = por %p147, %p148
      %p150 = scmp.ne.s32.totalorder %s141, %s142
      %p151 = scmp.eq.s32.totalorder %s21, 0
      %p152 = por %p150, %p151
      %p153 = scmp.ne.s32.totalorder %s141, %s142
      %p154 = scmp.eq.s32.totalorder %s22, 1
      %p155 = por %p153, %p154
      %p157 = scmp.ne.s32.totalorder %s142, %s156
      %p158 = scmp.eq.s32.totalorder %s22, 0
      %p159 = por %p157, %p158
      %s160 = ssub.s32 %s16, %s23
      %p161 = scmp.eq.s32.totalorder %s160, 0
      %s163 = sadd.s32 %s162, 1
      %s164 = scalar_select %p161, %s162, %s163
      %p167 = pneg %p161
      %p168 = scmp.eq.s32.totalorder %s16, 1
      %p169 = por %p167, %p168
      %p170 = scmp.ne.s32.totalorder %s162, %s165
      %p171 = scmp.eq.s32.totalorder %s16, 0
      %p172 = por %p170, %p171
      %p173 = scmp.ne.s32.totalorder %s162, %s165
      %p174 = scmp.eq.s32.totalorder %s21, 1
      %p175 = por %p173, %p174
      %p176 = scmp.ne.s32.totalorder %s165, %s166
      %p177 = scmp.eq.s32.totalorder %s21, 0
      %p178 = por %p176, %p177
      %p179 = scmp.ne.s32.totalorder %s165, %s166
      %p180 = scmp.eq.s32.totalorder %s22, 1
      %p181 = por %p179, %p180
      %p183 = scmp.ne.s32.totalorder %s166, %s182
      %p184 = scmp.eq.s32.totalorder %s22, 0
      %p185 = por %p183, %p184
      %p186 = scmp.le.s32.totalorder 1, %s16
      %p187 = scmp.lt.s32.totalorder %s16, 3
      %p188 = pnand %p186, %p187
      %p189 = pneg %p188
      // Predicated region
      $region9: #{_mpnn_forward_padded.5} parent=5 // pred_check
        _
      $region10: #{_mpnn_forward_padded.5} parent=5 // pred_check_branch
        %191 = sbr.rel (%p188) target = $region12
      $region11: #{_mpnn_forward_padded.5} parent=5 // pred_region
        %s192 = ssub.s32 %s16, 1
        // Predicated region
        $region13: #{_mpnn_forward_padded.5} parent=11 // pred_check
          %p193 = pneg %p89
        $region14: #{_mpnn_forward_padded.5} parent=11 // pred_check_branch
          %195 = sbr.rel (%p193) target = $region16
        $region15: #{_mpnn_forward_padded.5} parent=11 // pred_region
          _
        $region16: #{_mpnn_forward_padded.5} parent=11 // pred_fallthru
          _
        // Predicated region
        $region17: #{_mpnn_forward_padded.5} parent=11 // pred_check
          %p196 = pneg %p110
        $region18: #{_mpnn_forward_padded.5} parent=11 // pred_check_branch
          %198 = sbr.rel (%p196) target = $region20
        $region19: #{_mpnn_forward_padded.5} parent=11 // pred_region
          _
        $region20: #{_mpnn_forward_padded.5} parent=11 // pred_fallthru
          _
        // Predicated region
        $region21: #{_mpnn_forward_padded.5} parent=11 // pred_check
          %p199 = pneg %p131
        $region22: #{_mpnn_forward_padded.5} parent=11 // pred_check_branch
          %201 = sbr.rel (%p199) target = $region24
        $region23: #{_mpnn_forward_padded.5} parent=11 // pred_region
          %203 = vsyncadd [#allocation3], 0
          %s204 = sshll.u32 %s4, 4
          %s205 = int_to_ptr.hbm [resolvable:$true] %s204
          %s206 = sshll.u32 [#allocation2], 4
          %s207 = int_to_ptr.vmem [resolvable:$true] %s206
          %212 = dma.hbm_to_vmem [thread:$0]  %s205, 1024, %s207, [#allocation3], 64, 64, 4
        $region24: #{_mpnn_forward_padded.5} parent=11 // pred_fallthru
          _
        // Predicated region
        $region25: #{_mpnn_forward_padded.5} parent=11 // pred_check
          %p213 = pneg %p152
        $region26: #{_mpnn_forward_padded.5} parent=11 // pred_check_branch
          %215 = sbr.rel (%p213) target = $region28
        $region27: #{_mpnn_forward_padded.5} parent=11 // pred_region
          _
        $region28: #{_mpnn_forward_padded.5} parent=11 // pred_fallthru
          _
      $region12: #{_mpnn_forward_padded.5} parent=5 // pred_fallthru
        _
      %p216 = scmp.lt.s32.totalorder %s16, 2
      // Predicated region
      $region29: #{_mpnn_forward_padded.5} parent=5 // pred_check
        %p217 = pneg %p216
      $region30: #{_mpnn_forward_padded.5} parent=5 // pred_check_branch
        %219 = sbr.rel (%p217) target = $region32
      $region31: #{_mpnn_forward_padded.5} parent=5 // pred_region
        // Predicated region
        $region33: #{_mpnn_forward_padded.5} parent=31 // pred_check
          %p220 = pneg %p36
        $region34: #{_mpnn_forward_padded.5} parent=31 // pred_check_branch
          %222 = sbr.rel (%p220) target = $region36
        $region35: #{_mpnn_forward_padded.5} parent=31 // pred_region
          %s223 = smul.u32 2, %s16
          %p224 = scmp.lt.s32.totalorder %s223, 3
          %s225 = scalar_select %p224, %s223, 3
          %s226 = smul.addr %s225, 4
          %s227 = scalar_lea.vmem %s0, %s226
          %s228 = smul.u32 2, %s16
        $region36: #{_mpnn_forward_padded.5} parent=31 // pred_fallthru
          _
        // Predicated region
        $region37: #{_mpnn_forward_padded.5} parent=31 // pred_check
          %p229 = pneg %p62
        $region38: #{_mpnn_forward_padded.5} parent=31 // pred_check_branch
          %231 = sbr.rel (%p229) target = $region40
        $region39: #{_mpnn_forward_padded.5} parent=31 // pred_region
          %s232 = smul.u32 2, %s16
          %p233 = scmp.lt.s32.totalorder %s232, 3
          %s234 = scalar_select %p233, %s232, 3
          %s235 = smul.addr %s234, 8
          %s236 = scalar_lea.vmem %s1, %s235
          %s237 = smul.u32 2, %s16
        $region40: #{_mpnn_forward_padded.5} parent=31 // pred_fallthru
          _
      $region32: #{_mpnn_forward_padded.5} parent=5 // pred_fallthru
        _
      %p238 = scmp.le.s32.totalorder 1, %s16
      %p239 = scmp.lt.s32.totalorder %s16, 3
      %p240 = pnand %p238, %p239
      %p241 = pneg %p240
      // Predicated region
      $region41: #{_mpnn_forward_padded.5} parent=5 // pred_check
        _
      $region42: #{_mpnn_forward_padded.5} parent=5 // pred_check_branch
        %243 = sbr.rel (%p240) target = $region44
      $region43: #{_mpnn_forward_padded.5} parent=5 // pred_region
        %s244 = ssub.s32 %s16, 1
        // Predicated region
        $region45: #{_mpnn_forward_padded.5} parent=43 // pred_check
          %p245 = pneg %p131
        $region46: #{_mpnn_forward_padded.5} parent=43 // pred_check_branch
          %247 = sbr.rel (%p245) target = $region48
        $region47: #{_mpnn_forward_padded.5} parent=43 // pred_region
          %249 = dma.done [#allocation3], 1024
        $region48: #{_mpnn_forward_padded.5} parent=43 // pred_fallthru
          _
        %s250 = smul.u32 2, %s21
        %p251 = scmp.lt.s32.totalorder %s250, 3
        %s252 = scalar_select %p251, %s250, 3
        %s253 = smul.addr %s252, 4
        %s254 = scalar_lea.vmem %s0, %s253
        %p255 = pneg %p42
        %p256 = pneg %p39
        %s257 = smul.u32 2, %s21
        %p258 = scmp.lt.s32.totalorder %s257, 3
        %s259 = scalar_select %p258, %s257, 3
        %s260 = smul.addr %s259, 8
        %s261 = scalar_lea.vmem %s1, %s260
        %p262 = pneg %p68
        %p263 = pneg %p65
        %p264 = pneg %p89
        %p265 = pneg %p86
        %p266 = pneg %p110
        %p267 = pneg %p107
        %p268 = pneg %p131
        %p269 = pneg %p128
        %p270 = pneg %p152
        %p271 = pneg %p149
        %p272 = pneg %p178
        %p273 = pneg %p175
        %s274 = sand.u32 %s165, 1
        %s275 = scalar_lea.sflag [#allocation4], %s274
        %s276 = sand.u32 %s165, 1
        %s277 = smul.addr %s276, 16
        %s278 = scalar_lea.vmem [#allocation5], %s277
        %s279 = smul.u32 2, %s21
        %p280 = scmp.lt.s32.totalorder %s279, 3
        %s281 = scalar_select %p280, %s279, 3
        %s282 = smul.addr %s281, 4
        %s283 = scalar_lea.vmem %s0, %s282
        %s284 = smul.u32 2, %s21
        %s285 = smul.u32 2, %s21
        %p286 = scmp.lt.s32.totalorder %s285, 3
        %s287 = scalar_select %p286, %s285, 3
        %s288 = smul.addr %s287, 8
        %s289 = scalar_lea.vmem %s1, %s288
        %s290 = smul.u32 2, %s21
        %s291 = smul.u32 2, %s21
        %v292 = vld [vmem:[%s2] sm:$0x1]
        %v293 = vld [vmem:[%s2 + $0x1] sm:$0x1]
        %vm294 = vcmask 1040384
        %v295 = vsel %vm294, %v292, 0.0
        %v296 = vsel %vm294, %v293, 0.0
        %v297 = vadd.f32 %v295, %v296
        %v298 = vmul.f32 %v297, 0.0625
        %v299 = vld [vmem:[%s3] sm:$0x1]
        %v300 = vld [vmem:[%s3 + $0x1] sm:$0x1]
        %v301 = vsel %vm294, %v299, 0.0
        %v302 = vsel %vm294, %v300, 0.0
        %v303 = vadd.f32 %v301, %v302
        %v304 = vmul.f32 %v303, 0.0625
        %v305 = vmul.f32 %v298, %v298
        %v306 = vsub.f32 %v304, %v305
        %v307 = vmax.f32 %v306, 0.0
        %v308 = vadd.f32 %v307, 1e-05
        %v309 = vrsqrt.pop %v308
        %v310 = vmul.f32 %v309, %v308
        %v311 = vmul.f32 %v310, %v309
        %v312 = vmul.f32 0.5, %v311
        %v313 = vsub.f32 1.5, %v312
        %v314 = vmul.f32 %v309, %v313
        %vm315 = vweird.f32 %v308
        %vm316 = vweird.f32 %v309
        %vm317 = vmor %vm315, %vm316
        %v318 = vsel %vm317, %v309, %v314
        %v319 = vld [vmem:[%s283] sm:$0xf]
        %v320 = vld [vmem:[%s283 + $0x4] sm:$0xf]
        %v321 = vunpack.c.l.bf16 %v319
        %v322 = vunpack.c.l.bf16 %v320
        %v323 = vperm.slane %v298, 0
        %v324 = vsub.f32 %v321, %v323
        %v325 = vsub.f32 %v322, %v323
        %v326 = vperm.slane %v318, 0
        %v327 = vmul.f32 %v324, %v326
        %v328 = vmul.f32 %v325, %v326
        %v329 = vmax.f32 %v327, 0.0
        %v330 = vmax.f32 %v328, 0.0
        %v331 = vld [vmem:[%s289] sm:$0xff]
        %v332 = vld [vmem:[%s289 + $0x8] sm:$0xff]
        %334 = vset.pattern.permute.xlu0 0
        %335 = vperm.xlu0 %334, %v331
        %v336 = vpop.permute.xlu0 %335
        %339 = vset.pattern.permute.xlu0 0
        %340 = vperm.xlu0 %339, %v332
        %v341 = vpop.permute.xlu0 %340
        %v343 = vmul.f32 %v329, %v336
        %v344 = vmul.f32 %v330, %v341
        %v345 = vpack.c.bf16 %v344, %v343
        %v346 = vld [vmem:[#allocation2] sm:$0xf]
        %v347 = vld [vmem:[#allocation2 + $0x4] sm:$0xf]
        %v348 = vld [vmem:[#allocation2 + $0x8] sm:$0xf]
        %v349 = vld [vmem:[#allocation2 + $0xc] sm:$0xf]
        %v350 = vld [vmem:[#allocation2 + $0x10] sm:$0xf]
        %v351 = vld [vmem:[#allocation2 + $0x14] sm:$0xf]
        %v352 = vld [vmem:[#allocation2 + $0x18] sm:$0xf]
        %v353 = vld [vmem:[#allocation2 + $0x1c] sm:$0xf]
        %v354 = vld [vmem:[#allocation2 + $0x20] sm:$0xf]
        %v355 = vld [vmem:[#allocation2 + $0x24] sm:$0xf]
        %v356 = vld [vmem:[#allocation2 + $0x28] sm:$0xf]
        %v357 = vld [vmem:[#allocation2 + $0x2c] sm:$0xf]
        %v358 = vld [vmem:[#allocation2 + $0x30] sm:$0xf]
        %v359 = vld [vmem:[#allocation2 + $0x34] sm:$0xf]
        %v360 = vld [vmem:[#allocation2 + $0x38] sm:$0xf]
        %v361 = vld [vmem:[#allocation2 + $0x3c] sm:$0xf]
        %v362 = vld [vmem:[%s5] sm:$0x1]
        %v364 = vperm.slane %v362, 0
        %v382 = vunpack.c.l.b16 %v346
        %v383 = vunpack.c.l.b16 %v347
        %v384 = vunpack.c.l.b16 %v348
        %v385 = vunpack.c.l.b16 %v349
        %v386 = vunpack.c.l.b16 %v350
        %v387 = vunpack.c.l.b16 %v351
        %v388 = vunpack.c.l.b16 %v352
        %v389 = vunpack.c.l.b16 %v353
        %v390 = vunpack.c.l.b16 %v354
        %v391 = vunpack.c.l.b16 %v355
        %v392 = vunpack.c.l.b16 %v356
        %v393 = vunpack.c.l.b16 %v357
        %v394 = vunpack.c.l.b16 %v358
        %v395 = vunpack.c.l.b16 %v359
        %v396 = vunpack.c.l.b16 %v360
        %v397 = vunpack.c.l.b16 %v361
        %v398 = vpack.c.b16 %v383, %v382
        %v399 = vpack.c.b16 %v385, %v384
        %v400 = vpack.c.b16 %v387, %v386
        %v401 = vpack.c.b16 %v389, %v388
        %v402 = vpack.c.b16 %v391, %v390
        %v403 = vpack.c.b16 %v393, %v392
        %v404 = vpack.c.b16 %v395, %v394
        %v405 = vpack.c.b16 %v397, %v396
        %414 = vmatpush.bf16.msra.mxu0 %v405
        %415 = vmatpush.bf16.msra.mxu0 %v404
        %416 = vmatpush.bf16.msra.mxu0 %v403
        %417 = vmatpush.bf16.msra.mxu0 %v402
        %418 = vmatpush.bf16.msra.mxu0 %v401
        %419 = vmatpush.bf16.msra.mxu0 %v400
        %420 = vmatpush.bf16.msra.mxu0 %v399
        %421 = vmatpush.bf16.msra.mxu0 %v398
        %422 = vmatmul.bf16.gmra.mxu0 %v345
        %v423 = vpop.f32.mrf.mxu0
        %v424 = vadd.f32 %v364, %v423
        %v425 = vpop.f32.mrf.mxu0
        %v426 = vadd.f32 %v364, %v425
        %427 = vdwg.mxu0
        %428 = vst [vmem:[%s278] sm:$0xff] %v424
        %429 = vst [vmem:[%s278 + $0x8] sm:$0xff] %v426
        %s430 = sand.u32 %s165, 1
        %s431 = scalar_lea.sflag [#allocation4], %s430
        %s432 = sand.u32 %s165, 1
        %s433 = smul.addr %s432, 16
        %s434 = scalar_lea.vmem [#allocation5], %s433
        // Predicated region
        $region49: #{_mpnn_forward_padded.5} parent=43 // pred_check
          %p435 = pneg %p175
        $region50: #{_mpnn_forward_padded.5} parent=43 // pred_check_branch
          %437 = sbr.rel (%p435) target = $region52
        $region51: #{_mpnn_forward_padded.5} parent=43 // pred_region
          %s438 = smul.u32 2, %s21
          %440 = vsyncadd %s431, 0
          %s441 = smul.addr %s438, 8
          %s442 = scalar_lea.hbm %s6, %s441
          %s443 = sshll.u32 %s434, 4
          %s444 = int_to_ptr.vmem [resolvable:$true] %s443
          %s445 = sshll.u32 %s442, 4
          %s446 = int_to_ptr.hbm [resolvable:$true] %s445
          %451 = dma.vmem_to_hbm [thread:$0]  %s444, 256, %s446, %s431, 128, 128, 8
        $region52: #{_mpnn_forward_padded.5} parent=43 // pred_fallthru
          _
      $region44: #{_mpnn_forward_padded.5} parent=5 // pred_fallthru
        _
      %p452 = scmp.le.s32.totalorder 2, %s16
      // Predicated region
      $region53: #{_mpnn_forward_padded.5} parent=5 // pred_check
        %p453 = pneg %p452
      $region54: #{_mpnn_forward_padded.5} parent=5 // pred_check_branch
        %455 = sbr.rel (%p453) target = $region56
      $region55: #{_mpnn_forward_padded.5} parent=5 // pred_region
        %s456 = ssub.s32 %s16, 2
        // Predicated region
        $region57: #{_mpnn_forward_padded.5} parent=55 // pred_check
          %p457 = pneg %p181
        $region58: #{_mpnn_forward_padded.5} parent=55 // pred_check_branch
          %459 = sbr.rel (%p457) target = $region60
        $region59: #{_mpnn_forward_padded.5} parent=55 // pred_region
          %s460 = sand.u32 %s166, 1
          %s461 = scalar_lea.sflag [#allocation4], %s460
          %s462 = sand.u32 %s166, 1
          %s463 = smul.addr %s462, 16
          %s464 = scalar_lea.vmem [#allocation5], %s463
          %466 = dma.done %s461, 256
        $region60: #{_mpnn_forward_padded.5} parent=55 // pred_fallthru
          _
      $region56: #{_mpnn_forward_padded.5} parent=5 // pred_fallthru
        _
    $region6: #{_mpnn_forward_padded.5} parent=1 // loop_footer
      %s20 = sadd.s32 1, %s16
    $region7: #{_mpnn_forward_padded.5} parent=1 // loop_footer_branch
      %15 = sbr.rel target = $region3
    $region8: #{_mpnn_forward_padded.5} parent=1 // loop_exit
      _
    %467 = vsyncpa [#allocation3], 1
    %s468 = scalar_lea.sflag [#allocation3], 1
    %469 = vsyncpa %s468, 1
    %470 = vsyncpa [#allocation4], 1
    %s471 = scalar_lea.sflag [#allocation4], 1
    %472 = vsyncpa %s471, 1

</llo_original>
